<compile_context>
chip_gen: v5e
topology: v5e:2x2
jax: 0.10.0
libtpu: 0.0.40
codegen_flags: <defaults>
</compile_context>

<pallas_src>
import functools
from collections import namedtuple

import numpy as np
import jax
import jax.numpy as jnp
from jax.experimental import pallas as pl
from jax.experimental.pallas import tpu as pltpu

BN_EPS = 1e-5
BN_SCALE = 1.0 / np.sqrt(1.0 + BN_EPS)        # fresh BatchNorm2d, eval mode (bias == 0)

Genotype = namedtuple("Genotype", "normal normal_concat reduce reduce_concat")

GENOTYPE = Genotype(
    normal=[("skip_connect", 0), ("skip_connect", 1),
            ("skip_connect", 1), ("skip_connect", 2),
            ("skip_connect", 0), ("skip_connect", 2),
            ("skip_connect", 2), ("skip_connect", 3)],
    normal_concat=[2, 3, 4, 5],
    reduce=[("skip_connect", 0), ("skip_connect", 1),
            ("skip_connect", 1), ("skip_connect", 2),
            ("skip_connect", 0), ("skip_connect", 2),
            ("skip_connect", 2), ("skip_connect", 3)],
    reduce_concat=[2, 3, 4, 5],
)


# ----------------------------------------------------------------------------
# small helpers
# ----------------------------------------------------------------------------
def _full_spec(shape):
    """Whole-array VMEM block (exempt from the (8,128) divisibility rule)."""
    shape = tuple(int(s) for s in shape)
    return pl.BlockSpec(shape, lambda i: (0,) * len(shape))


def _relu_mm(x, w):
    """ReLU -> 1x1 conv (as matmul); BN scale already folded into w."""
    return jnp.dot(jnp.maximum(x, 0.0), w, preferred_element_type=jnp.float32)


_COMPILER_PARAMS = pltpu.CompilerParams(dimension_semantics=("arbitrary",))


# ----------------------------------------------------------------------------
# Stem: ZeroPad2d((1,0,1,0)) + Conv2d(kernel=2, bias=False) + ReLU
# ----------------------------------------------------------------------------
def stem_forward(x_nhwc, stem_w):
    """Returns the stem feature map flattened NHWC -> (n*h*w, c_stem)."""
    n, h, w, cin = x_nhwc.shape
    cout = stem_w.shape[-1]
    xp = jnp.pad(x_nhwc, ((0, 0), (1, 0), (1, 0), (0, 0)))       # pad top/left
    # im2col of the tiny padded input (< 1 KB here) is cheap XLA glue; the
    # matmul + ReLU run in one kernel.
    # TODO(synk): for large inputs, gather the 2x2 taps from shifted VMEM
    # views inside the kernel instead of materializing im2col in HBM.
    cols = [xp[:, kh:kh + h, kw:kw + w, :] for kh in range(2) for kw in range(2)]
    a = jnp.concatenate(cols, axis=-1).reshape(n * h * w, 4 * cin)

    def kernel(a_ref, w_ref, o_ref):
        o_ref[...] = jnp.maximum(
            jnp.dot(a_ref[...], w_ref[...], preferred_element_type=jnp.float32),
            0.0)                                                  # stem has no BN

    return pl.pallas_call(
        kernel,
        out_shape=jax.ShapeDtypeStruct((n * h * w, cout), jnp.float32),
        grid=(1,),
        in_specs=[_full_spec(a.shape), _full_spec(stem_w.shape)],
        out_specs=_full_spec((n * h * w, cout)),
        compiler_params=_COMPILER_PARAMS,
    )(a.astype(jnp.float32), stem_w.astype(jnp.float32))


# ----------------------------------------------------------------------------
# One fused kernel per DARTS cell
# ----------------------------------------------------------------------------
def cell_forward(s0, s1, hw0, hw1, n, cp):
    """Fused DARTS cell.

    s0 / s1: NHWC activations flattened to (n*h*w, c).
    Everything except the tiny spatial even/odd sub-sampling (input glue for
    stride-2 ops) happens inside a single pallas_call.
    Returns (out_2d, (h_out, w_out)).
    """
    (h0, w0), (h1, w1) = hw0, hw1
    reduction = cp["reduction"]

    acts, weights = [], []

    def add_act(a):
        acts.append(a.astype(jnp.float32))
        return len(acts) - 1

    def add_w(w):
        weights.append(w.astype(jnp.float32))
        return len(weights) - 1

    def even_odd(x2d, h, w):
        c = x2d.shape[-1]
        x4 = x2d.reshape(n, h, w, c)
        ee = x4[:, ::2, ::2, :].reshape(n * (h // 2) * (w // 2), c)
        oo = x4[:, 1::2, 1::2, :].reshape(n * (h // 2) * (w // 2), c)
        return ee, oo

    # ---- preprocess plan ----------------------------------------------------
    # A state is either a plain 2D value, or (for the stride-2 inputs of a
    # reduction cell) an (even, odd) pair of sub-grid values: since the 1x1
    # preprocess conv is pointwise, it can be applied directly on the sub-grids
    # that the FactorizedReduce ops consume.
    pre_plan = []
    if reduction:
        # states 0/1 are only reached through stride-2 ops and never concat'ed.
        assert cp["pre0"][0] == "rcb" and cp["pre1"][0] == "rcb", (
            "reduction cell preceded by a reduction cell never occurs here")
        # TODO(synk): support FactorizedReduce-preprocess inside a reduction cell
        for (s, h, w, pre) in ((s0, h0, w0, cp["pre0"]), (s1, h1, w1, cp["pre1"])):
            ee, oo = even_odd(s, h, w)
            pre_plan.append(("pair_rcb", add_act(ee), add_act(oo), add_w(pre[1])))
        h_out, w_out = h1 // 2, w1 // 2
    else:
        for (s, h, w, pre) in ((s0, h0, w0, cp["pre0"]), (s1, h1, w1, cp["pre1"])):
            if pre[0] == "fr":                       # FactorizedReduce preprocess
                ee, oo = even_odd(s, h, w)
                pre_plan.append(("fr", add_act(ee), add_act(oo),
                                 add_w(pre[1]), add_w(pre[2])))
            else:                                    # ReLUConvBN preprocess
                pre_plan.append(("rcb", add_act(s), add_w(pre[1])))
        h_out, w_out = h1, w1

    # ---- op plan ------------------------------------------------------------
    op_plan = []
    for op in cp["ops"]:
        if op[0] == "id":
            op_plan.append(("id",))
        else:                                        # FactorizedReduce (stride 2)
            op_plan.append(("fr", add_w(op[1]), add_w(op[2])))

    indices, concat, steps, c = cp["indices"], cp["concat"], cp["steps"], cp["c"]
    rows_out = n * h_out * w_out
    n_act, n_w = len(acts), len(weights)

    def kernel(*refs):
        av = [refs[i][...] for i in range(n_act)]
        wv = [refs[n_act + i][...] for i in range(n_w)]
        out_ref = refs[n_act + n_w]

        states = []
        for p in pre_plan:
            if p[0] == "rcb":
                states.append(_relu_mm(av[p[1]], wv[p[2]]))
            elif p[0] == "fr":
                # wide (zero-padded) weight halves -> no lane-dim concat needed
                states.append(_relu_mm(av[p[1]], wv[p[3]]) +
                              _relu_mm(av[p[2]], wv[p[4]]))
            else:  # "pair_rcb": keep the (even, odd) halves for stride-2 ops
                states.append((_relu_mm(av[p[1]], wv[p[3]]),
                               _relu_mm(av[p[2]], wv[p[3]])))

        def apply_op(op, st):
            if op[0] == "id":
                return st
            ee, oo = st
            return _relu_mm(ee, wv[op[1]]) + _relu_mm(oo, wv[op[2]])

        for i in range(steps):
            h1v = apply_op(op_plan[2 * i], states[indices[2 * i]])
            h2v = apply_op(op_plan[2 * i + 1], states[indices[2 * i + 1]])
            states.append(h1v + h2v)     # drop_path never fires (prob = -1)

        for j, si in enumerate(concat):  # stacked-state output (leading-axis store)
            out_ref[j] = states[si]

    args = acts + weights
    stacked = pl.pallas_call(
        kernel,
        out_shape=jax.ShapeDtypeStruct((len(concat), rows_out, c), jnp.float32),
        grid=(1,),
        in_specs=[_full_spec(a.shape) for a in args],
        out_specs=_full_spec((len(concat), rows_out, c)),
        compiler_params=_COMPILER_PARAMS,
    )(*args)

    # torch.cat(dim=1) on NCHW == channel concat in NHWC (tiny XLA glue, fused by jit)
    out2d = jnp.transpose(stacked, (1, 0, 2)).reshape(rows_out, len(concat) * c)
    return out2d, (h_out, w_out)


# ----------------------------------------------------------------------------
# Fused FC stack: all hidden Linear+ReLU layers + classifier in one kernel
# ----------------------------------------------------------------------------
def fc_forward(feat, fc_params, clf_params):
    n = feat.shape[0]
    rows = ((n + 7) // 8) * 8                 # sublane multiple only (not 128)
    if rows != n:
        # padded rows get bias+ReLU but are sliced off; nothing reduces over M.
        feat = jnp.pad(feat, ((0, rows - n), (0, 0)))

    n_hidden = len(fc_params)
    num_classes = clf_params[0].shape[-1]
    args = [feat.astype(jnp.float32)]
    for w, b in list(fc_params) + [clf_params]:
        args += [w.astype(jnp.float32), b.astype(jnp.float32)]

    def kernel(*refs):
        out_ref = refs[-1]
        hcur = refs[0][...]
        pos = 1
        for _ in range(n_hidden):
            w = refs[pos][...]
            b = refs[pos + 1][...]
            pos += 2
            hcur = jnp.maximum(
                jnp.dot(hcur, w, preferred_element_type=jnp.float32) + b, 0.0)
            # nn.Dropout in eval mode is the identity.
        w = refs[pos][...]
        b = refs[pos + 1][...]
        out_ref[...] = jnp.dot(hcur, w, preferred_element_type=jnp.float32) + b

    out = pl.pallas_call(
        kernel,
        out_shape=jax.ShapeDtypeStruct((rows, num_classes), jnp.float32),
        grid=(1,),
        in_specs=[_full_spec(a.shape) for a in args],
        out_specs=_full_spec((rows, num_classes)),
        compiler_params=_COMPILER_PARAMS,
    )(*args)
    return out[:n]


# ----------------------------------------------------------------------------
# Deterministic parameter construction (mirrors module __init__)
# ----------------------------------------------------------------------------
class ParamFactory:
    def __init__(self, seed=0):
        self.key = jax.random.PRNGKey(seed)

    def normal(self, shape, scale=0.1):
        self.key, sub = jax.random.split(self.key)
        return jax.random.normal(sub, shape, jnp.float32) * scale


def make_rcb(pf, c_in, c_out):
    # ReLU -> Conv2d(c_in, c_out, 1, bias=False) -> BatchNorm2d (eval, folded)
    w_t = pf.normal((c_out, c_in))                   # torch (Cout, Cin, 1, 1)
    w = jnp.transpose(w_t, (1, 0)) * BN_SCALE        # BN bias == 0
    return ("rcb", w)


def make_fr(pf, c_in, c_out):
    # ReLU -> conv_1(x[::2,::2]) ++ conv_2(x[1::2,1::2]) -> BatchNorm2d (eval).
    # Stored as zero-padded full-width halves: fr = relu(ee)@w1w + relu(oo)@w2w.
    half = c_out // 2
    w1 = jnp.transpose(pf.normal((half, c_in)), (1, 0)) * BN_SCALE
    w2 = jnp.transpose(pf.normal((half, c_in)), (1, 0)) * BN_SCALE
    zeros = jnp.zeros((c_in, c_out - half), jnp.float32)
    w1_wide = jnp.concatenate([w1, zeros], axis=1)
    w2_wide = jnp.concatenate([zeros, w2], axis=1)
    return ("fr", w1_wide, w2_wide)


def make_cell(pf, genotype, c_pp, c_p, c, reduction, reduction_prev):
    pre0 = make_fr(pf, c_pp, c) if reduction_prev else make_rcb(pf, c_pp, c)
    pre1 = make_rcb(pf, c_p, c)
    if reduction:
        op_names, indices = zip(*genotype.reduce)
        concat = list(genotype.reduce_concat)
    else:
        op_names, indices = zip(*genotype.normal)
        concat = list(genotype.normal_concat)
    ops = []
    for name, index in zip(op_names, indices):
        stride = 2 if reduction and index < 2 else 1
        assert name == "skip_connect"                # only op used in GENOTYPE
        ops.append(("id",) if stride == 1 else make_fr(pf, c, c))
    return {"pre0": pre0, "pre1": pre1, "ops": ops, "indices": indices,
            "concat": concat, "steps": len(op_names) // 2,
            "multiplier": len(concat), "c": c,
            "reduction": reduction, "reduction_prev": reduction_prev}


def build_darts_model(genotype, config, input_shape=(1, 8, 8), num_classes=10,
                      seed=0):
    pf = ParamFactory(seed)
    layers = config["n_cells"]
    c = config["init_channels"]
    stem_multiplier = 3
    c_curr = int(stem_multiplier * c)
    c_in, h, w = input_shape

    stem_w_t = pf.normal((c_curr, c_in, 2, 2))       # torch Conv2d weight
    stem_w = jnp.transpose(stem_w_t, (2, 3, 1, 0)).reshape(4 * c_in, c_curr)
    params = {"stem_w": stem_w, "cells": []}

    c_pp, c_p, c_curr = c_curr, c_curr, c
    reduction_prev = False
    spatial = (h, w)
    for i in range(layers):
        if i in (1, 3):
            c_curr *= 2
            reduction = True
        else:
            reduction = False
        cell = make_cell(pf, genotype, c_pp, c_p, c_curr, reduction, reduction_prev)
        reduction_prev = reduction
        params["cells"].append(cell)
        c_pp, c_p = c_p, cell["multiplier"] * c_curr
        if reduction:
            spatial = (spatial[0] // 2, spatial[1] // 2)

    # analytic equivalent of dartsModel._get_conv_output()
    n_in = c_p * spatial[0] * spatial[1]
    n_out = config["n_hidden_units"]
    params["fc"] = []
    for _ in range(config["n_hidden_layers"]):
        w_t = pf.normal((int(n_out), int(n_in)))     # torch Linear weight
        b = pf.normal((int(n_out),))
        params["fc"].append((jnp.transpose(w_t, (1, 0)), b.reshape(1, -1)))
        n_in = n_out
        n_out /= 2
    w_t = pf.normal((num_classes, int(n_in)))
    b = pf.normal((num_classes,))
    params["classifier"] = (jnp.transpose(w_t, (1, 0)), b.reshape(1, -1))
    return params


# ----------------------------------------------------------------------------
# Model forward (mirrors dartsModel.forward) — 5 pallas_calls total
# ----------------------------------------------------------------------------
def darts_forward(params, x_nchw):
    n = x_nchw.shape[0]
    x = jnp.transpose(x_nchw, (0, 2, 3, 1)).astype(jnp.float32)   # NCHW -> NHWC
    h, w = x.shape[1], x.shape[2]

    stem = stem_forward(x, params["stem_w"])                      # (n*h*w, c_stem)
    s0 = s1 = stem
    hw0 = hw1 = (h, w)
    for cp in params["cells"]:
        out2d, hw_out = cell_forward(s0, s1, hw0, hw1, n, cp)
        s0, hw0 = s1, hw1
        s1, hw1 = out2d, hw_out

    hh, ww = hw1
    c_last = s1.shape[-1]
    # flatten in torch (C, H, W) order to match s1.view(N, -1)
    feat = jnp.transpose(s1.reshape(n, hh, ww, c_last), (0, 3, 1, 2)).reshape(n, -1)
    return fc_forward(feat, params["fc"], params["classifier"])


if __name__ == "__main__":
    config = {"n_cells": 3, "init_channels": 4, "n_hidden_units": 32,
              "n_hidden_layers": 2, "dropout_ratio": 0.0}
    input_shape = (1, 8, 8)          # (C, H, W), small analogue of (1, 28, 28)
    num_classes = 10

    params = build_darts_model(GENOTYPE, config, input_shape=input_shape,
                               num_classes=num_classes, seed=0)

    x = jax.random.normal(jax.random.PRNGKey(0), (2,) + input_shape, jnp.float32)
    forward = jax.jit(functools.partial(darts_forward, params))
    logits = jax.block_until_ready(forward(x))

    assert logits.shape == (2, num_classes)
    assert bool(jnp.all(jnp.isfinite(logits)))
    print("KERNEL_OK")
</pallas_src>

<mosaic_0001>
module attributes {stable_mosaic.version = 11 : i64} {
  func.func @kernel(%arg0: i32, %arg1: memref<128x4xf32, #tpu.memory_space<vmem>>, %arg2: memref<4x12xf32, #tpu.memory_space<vmem>>, %arg3: memref<128x12xf32, #tpu.memory_space<vmem>>) attributes {dimension_semantics = [#tpu.dimension_semantics<arbitrary>], iteration_bounds = array<i64: 1>, scalar_prefetch = 0 : i64, scratch_operands = 0 : i64, tpu.core_type = #tpu.core_type<tc>, window_params = [{pipeline_mode = #tpu.pipeline_mode<synchronous>, transform_indices = @transform_0, window_bounds = array<i64: 128, 4>}, {pipeline_mode = #tpu.pipeline_mode<synchronous>, transform_indices = @transform_1, window_bounds = array<i64: 4, 12>}, {pipeline_mode = #tpu.pipeline_mode<synchronous>, transform_indices = @transform_2, window_bounds = array<i64: 128, 12>}]} {
    %c0 = arith.constant 0 : index
    %c0_0 = arith.constant 0 : index
    %0 = vector.load %arg1[%c0, %c0_0] : memref<128x4xf32, #tpu.memory_space<vmem>>, vector<128x4xf32>
    %c0_1 = arith.constant 0 : index
    %c0_2 = arith.constant 0 : index
    %1 = vector.load %arg2[%c0_1, %c0_2] : memref<4x12xf32, #tpu.memory_space<vmem>>, vector<4x12xf32>
    %cst = arith.constant dense<0.000000e+00> : vector<128x12xf32>
    %2 = tpu.matmul %0, %1, %cst {dimension_numbers = #tpu.dot_dimension_numbers<[1], [0], [0], [1], [0, 0, 1, 1], [], []>} : vector<128x4xf32>, vector<4x12xf32>, vector<128x12xf32> -> vector<128x12xf32>
    %cst_3 = arith.constant 0.000000e+00 : f32
    %3 = vector.broadcast %cst_3 : f32 to vector<128x12xf32>
    %4 = arith.maximumf %2, %3 : vector<128x12xf32>
    %c0_4 = arith.constant 0 : index
    %c0_5 = arith.constant 0 : index
    %5 = vector.load %arg3[%c0_4, %c0_5] : memref<128x12xf32, #tpu.memory_space<vmem>>, vector<128x12xf32>
    tpu.vector_store %arg3[%c0_4, %c0_5], %4 {strides = array<i32>} : memref<128x12xf32, #tpu.memory_space<vmem>>, vector<128x12xf32>,
    return
  }
  func.func @transform_0(%arg0: i32) -> (i32, i32) {
    %c0_i32 = arith.constant 0 : i32
    %c0_i32_0 = arith.constant 0 : i32
    %c0_i32_1 = arith.constant 0 : i32
    return %c0_i32, %c0_i32_0 : i32, i32
  }
  func.func @transform_1(%arg0: i32) -> (i32, i32) {
    %c0_i32 = arith.constant 0 : i32
    %c0_i32_0 = arith.constant 0 : i32
    %c0_i32_1 = arith.constant 0 : i32
    return %c0_i32, %c0_i32_0 : i32, i32
  }
  func.func @transform_2(%arg0: i32) -> (i32, i32) {
    %c0_i32 = arith.constant 0 : i32
    %c0_i32_0 = arith.constant 0 : i32
    %c0_i32_1 = arith.constant 0 : i32
    return %c0_i32, %c0_i32_0 : i32, i32
  }
}

module attributes {stable_mosaic.version = 11 : i64} {
  func.func @kernel(%arg0: i32, %arg1: memref<128x12xf32, #tpu.memory_space<vmem>>, %arg2: memref<128x12xf32, #tpu.memory_space<vmem>>, %arg3: memref<12x4xf32, #tpu.memory_space<vmem>>, %arg4: memref<12x4xf32, #tpu.memory_space<vmem>>, %arg5: memref<4x128x4xf32, #tpu.memory_space<vmem>>) attributes {dimension_semantics = [#tpu.dimension_semantics<arbitrary>], iteration_bounds = array<i64: 1>, scalar_prefetch = 0 : i64, scratch_operands = 0 : i64, tpu.core_type = #tpu.core_type<tc>, window_params = [{pipeline_mode = #tpu.pipeline_mode<synchronous>, transform_indices = @transform_0, window_bounds = array<i64: 128, 12>}, {pipeline_mode = #tpu.pipeline_mode<synchronous>, transform_indices = @transform_1, window_bounds = array<i64: 128, 12>}, {pipeline_mode = #tpu.pipeline_mode<synchronous>, transform_indices = @transform_2, window_bounds = array<i64: 12, 4>}, {pipeline_mode = #tpu.pipeline_mode<synchronous>, transform_indices = @transform_3, window_bounds = array<i64: 12, 4>}, {pipeline_mode = #tpu.pipeline_mode<synchronous>, transform_indices = @transform_4, window_bounds = array<i64: 4, 128, 4>}]} {
    %c0 = arith.constant 0 : index
    %c0_0 = arith.constant 0 : index
    %0 = vector.load %arg1[%c0, %c0_0] : memref<128x12xf32, #tpu.memory_space<vmem>>, vector<128x12xf32>
    %c0_1 = arith.constant 0 : index
    %c0_2 = arith.constant 0 : index
    %1 = vector.load %arg2[%c0_1, %c0_2] : memref<128x12xf32, #tpu.memory_space<vmem>>, vector<128x12xf32>
    %c0_3 = arith.constant 0 : index
    %c0_4 = arith.constant 0 : index
    %2 = vector.load %arg3[%c0_3, %c0_4] : memref<12x4xf32, #tpu.memory_space<vmem>>, vector<12x4xf32>
    %c0_5 = arith.constant 0 : index
    %c0_6 = arith.constant 0 : index
    %3 = vector.load %arg4[%c0_5, %c0_6] : memref<12x4xf32, #tpu.memory_space<vmem>>, vector<12x4xf32>
    %cst = arith.constant 0.000000e+00 : f32
    %4 = vector.broadcast %cst : f32 to vector<128x12xf32>
    %5 = arith.maximumf %0, %4 : vector<128x12xf32>
    %cst_7 = arith.constant dense<0.000000e+00> : vector<128x4xf32>
    %6 = tpu.matmul %5, %2, %cst_7 {dimension_numbers = #tpu.dot_dimension_numbers<[1], [0], [0], [1], [0, 0, 1, 1], [], []>} : vector<128x12xf32>, vector<12x4xf32>, vector<128x4xf32> -> vector<128x4xf32>
    %cst_8 = arith.constant 0.000000e+00 : f32
    %7 = vector.broadcast %cst_8 : f32 to vector<128x12xf32>
    %8 = arith.maximumf %1, %7 : vector<128x12xf32>
    %cst_9 = arith.constant dense<0.000000e+00> : vector<128x4xf32>
    %9 = tpu.matmul %8, %3, %cst_9 {dimension_numbers = #tpu.dot_dimension_numbers<[1], [0], [0], [1], [0, 0, 1, 1], [], []>} : vector<128x12xf32>, vector<12x4xf32>, vector<128x4xf32> -> vector<128x4xf32>
    %10 = arith.addf %6, %9 : vector<128x4xf32>
    %11 = arith.addf %9, %10 : vector<128x4xf32>
    %12 = arith.addf %6, %10 : vector<128x4xf32>
    %13 = arith.addf %10, %11 : vector<128x4xf32>
    %c0_10 = arith.constant 0 : index
    %c0_11 = arith.constant 0 : index
    %c0_12 = arith.constant 0 : index
    %14 = vector.load %arg5[%c0_10, %c0_11, %c0_12] : memref<4x128x4xf32, #tpu.memory_space<vmem>>, vector<1x128x4xf32>
    %15 = vector.shape_cast %14 : vector<1x128x4xf32> to vector<128x4xf32>
    %16 = vector.shape_cast %10 : vector<128x4xf32> to vector<1x128x4xf32>
    tpu.vector_store %arg5[%c0_10, %c0_11, %c0_12], %16 {strides = array<i32>} : memref<4x128x4xf32, #tpu.memory_space<vmem>>, vector<1x128x4xf32>,
    %c1 = arith.constant 1 : index
    %c0_13 = arith.constant 0 : index
    %c0_14 = arith.constant 0 : index
    %17 = vector.load %arg5[%c1, %c0_13, %c0_14] : memref<4x128x4xf32, #tpu.memory_space<vmem>>, vector<1x128x4xf32>
    %18 = vector.shape_cast %17 : vector<1x128x4xf32> to vector<128x4xf32>
    %19 = vector.shape_cast %11 : vector<128x4xf32> to vector<1x128x4xf32>
    tpu.vector_store %arg5[%c1, %c0_13, %c0_14], %19 {strides = array<i32>} : memref<4x128x4xf32, #tpu.memory_space<vmem>>, vector<1x128x4xf32>,
    %c2 = arith.constant 2 : index
    %c0_15 = arith.constant 0 : index
    %c0_16 = arith.constant 0 : index
    %20 = vector.load %arg5[%c2, %c0_15, %c0_16] : memref<4x128x4xf32, #tpu.memory_space<vmem>>, vector<1x128x4xf32>
    %21 = vector.shape_cast %20 : vector<1x128x4xf32> to vector<128x4xf32>
    %22 = vector.shape_cast %12 : vector<128x4xf32> to vector<1x128x4xf32>
    tpu.vector_store %arg5[%c2, %c0_15, %c0_16], %22 {strides = array<i32>} : memref<4x128x4xf32, #tpu.memory_space<vmem>>, vector<1x128x4xf32>,
    %c3 = arith.constant 3 : index
    %c0_17 = arith.constant 0 : index
    %c0_18 = arith.constant 0 : index
    %23 = vector.load %arg5[%c3, %c0_17, %c0_18] : memref<4x128x4xf32, #tpu.memory_space<vmem>>, vector<1x128x4xf32>
    %24 = vector.shape_cast %23 : vector<1x128x4xf32> to vector<128x4xf32>
    %25 = vector.shape_cast %13 : vector<128x4xf32> to vector<1x128x4xf32>
    tpu.vector_store %arg5[%c3, %c0_17, %c0_18], %25 {strides = array<i32>} : memref<4x128x4xf32, #tpu.memory_space<vmem>>, vector<1x128x4xf32>,
    return
  }
  func.func @transform_0(%arg0: i32) -> (i32, i32) {
    %c0_i32 = arith.constant 0 : i32
    %c0_i32_0 = arith.constant 0 : i32
    %c0_i32_1 = arith.constant 0 : i32
    return %c0_i32, %c0_i32_0 : i32, i32
  }
  func.func @transform_1(%arg0: i32) -> (i32, i32) {
    %c0_i32 = arith.constant 0 : i32
    %c0_i32_0 = arith.constant 0 : i32
    %c0_i32_1 = arith.constant 0 : i32
    return %c0_i32, %c0_i32_0 : i32, i32
  }
  func.func @transform_2(%arg0: i32) -> (i32, i32) {
    %c0_i32 = arith.constant 0 : i32
    %c0_i32_0 = arith.constant 0 : i32
    %c0_i32_1 = arith.constant 0 : i32
    return %c0_i32, %c0_i32_0 : i32, i32
  }
  func.func @transform_3(%arg0: i32) -> (i32, i32) {
    %c0_i32 = arith.constant 0 : i32
    %c0_i32_0 = arith.constant 0 : i32
    %c0_i32_1 = arith.constant 0 : i32
    return %c0_i32, %c0_i32_0 : i32, i32
  }
  func.func @transform_4(%arg0: i32) -> (i32, i32, i32) {
    %c0_i32 = arith.constant 0 : i32
    %c0_i32_0 = arith.constant 0 : i32
    %c0_i32_1 = arith.constant 0 : i32
    %c0_i32_2 = arith.constant 0 : i32
    return %c0_i32, %c0_i32_0, %c0_i32_1 : i32, i32, i32
  }
}

module attributes {stable_mosaic.version = 11 : i64} {
  func.func @kernel(%arg0: i32, %arg1: memref<32x12xf32, #tpu.memory_space<vmem>>, %arg2: memref<32x12xf32, #tpu.memory_space<vmem>>, %arg3: memref<32x16xf32, #tpu.memory_space<vmem>>, %arg4: memref<32x16xf32, #tpu.memory_space<vmem>>, %arg5: memref<12x8xf32, #tpu.memory_space<vmem>>, %arg6: memref<16x8xf32, #tpu.memory_space<vmem>>, %arg7: memref<8x8xf32, #tpu.memory_space<vmem>>, %arg8: memref<8x8xf32, #tpu.memory_space<vmem>>, %arg9: memref<8x8xf32, #tpu.memory_space<vmem>>, %arg10: memref<8x8xf32, #tpu.memory_space<vmem>>, %arg11: memref<8x8xf32, #tpu.memory_space<vmem>>, %arg12: memref<8x8xf32, #tpu.memory_space<vmem>>, %arg13: memref<8x8xf32, #tpu.memory_space<vmem>>, %arg14: memref<8x8xf32, #tpu.memory_space<vmem>>, %arg15: memref<4x32x8xf32, #tpu.memory_space<vmem>>) attributes {dimension_semantics = [#tpu.dimension_semantics<arbitrary>], iteration_bounds = array<i64: 1>, scalar_prefetch = 0 : i64, scratch_operands = 0 : i64, tpu.core_type = #tpu.core_type<tc>, window_params = [{pipeline_mode = #tpu.pipeline_mode<synchronous>, transform_indices = @transform_0, window_bounds = array<i64: 32, 12>}, {pipeline_mode = #tpu.pipeline_mode<synchronous>, transform_indices = @transform_1, window_bounds = array<i64: 32, 12>}, {pipeline_mode = #tpu.pipeline_mode<synchronous>, transform_indices = @transform_2, window_bounds = array<i64: 32, 16>}, {pipeline_mode = #tpu.pipeline_mode<synchronous>, transform_indices = @transform_3, window_bounds = array<i64: 32, 16>}, {pipeline_mode = #tpu.pipeline_mode<synchronous>, transform_indices = @transform_4, window_bounds = array<i64: 12, 8>}, {pipeline_mode = #tpu.pipeline_mode<synchronous>, transform_indices = @transform_5, window_bounds = array<i64: 16, 8>}, {pipeline_mode = #tpu.pipeline_mode<synchronous>, transform_indices = @transform_6, window_bounds = array<i64: 8, 8>}, {pipeline_mode = #tpu.pipeline_mode<synchronous>, transform_indices = @transform_7, window_bounds = array<i64: 8, 8>}, {pipeline_mode = #tpu.pipeline_mode<synchronous>, transform_indices = @transform_8, window_bounds = array<i64: 8, 8>}, {pipeline_mode = #tpu.pipeline_mode<synchronous>, transform_indices = @transform_9, window_bounds = array<i64: 8, 8>}, {pipeline_mode = #tpu.pipeline_mode<synchronous>, transform_indices = @transform_10, window_bounds = array<i64: 8, 8>}, {pipeline_mode = #tpu.pipeline_mode<synchronous>, transform_indices = @transform_11, window_bounds = array<i64: 8, 8>}, {pipeline_mode = #tpu.pipeline_mode<synchronous>, transform_indices = @transform_12, window_bounds = array<i64: 8, 8>}, {pipeline_mode = #tpu.pipeline_mode<synchronous>, transform_indices = @transform_13, window_bounds = array<i64: 8, 8>}, {pipeline_mode = #tpu.pipeline_mode<synchronous>, transform_indices = @transform_14, window_bounds = array<i64: 4, 32, 8>}]} {
    %c0 = arith.constant 0 : index
    %c0_0 = arith.constant 0 : index
    %0 = vector.load %arg1[%c0, %c0_0] : memref<32x12xf32, #tpu.memory_space<vmem>>, vector<32x12xf32>
    %c0_1 = arith.constant 0 : index
    %c0_2 = arith.constant 0 : index
    %1 = vector.load %arg2[%c0_1, %c0_2] : memref<32x12xf32, #tpu.memory_space<vmem>>, vector<32x12xf32>
    %c0_3 = arith.constant 0 : index
    %c0_4 = arith.constant 0 : index
    %2 = vector.load %arg3[%c0_3, %c0_4] : memref<32x16xf32, #tpu.memory_space<vmem>>, vector<32x16xf32>
    %c0_5 = arith.constant 0 : index
    %c0_6 = arith.constant 0 : index
    %3 = vector.load %arg4[%c0_5, %c0_6] : memref<32x16xf32, #tpu.memory_space<vmem>>, vector<32x16xf32>
    %c0_7 = arith.constant 0 : index
    %c0_8 = arith.constant 0 : index
    %4 = vector.load %arg5[%c0_7, %c0_8] : memref<12x8xf32, #tpu.memory_space<vmem>>, vector<12x8xf32>
    %c0_9 = arith.constant 0 : index
    %c0_10 = arith.constant 0 : index
    %5 = vector.load %arg6[%c0_9, %c0_10] : memref<16x8xf32, #tpu.memory_space<vmem>>, vector<16x8xf32>
    %c0_11 = arith.constant 0 : index
    %c0_12 = arith.constant 0 : index
    %6 = vector.load %arg7[%c0_11, %c0_12] : memref<8x8xf32, #tpu.memory_space<vmem>>, vector<8x8xf32>
    %c0_13 = arith.constant 0 : index
    %c0_14 = arith.constant 0 : index
    %7 = vector.load %arg8[%c0_13, %c0_14] : memref<8x8xf32, #tpu.memory_space<vmem>>, vector<8x8xf32>
    %c0_15 = arith.constant 0 : index
    %c0_16 = arith.constant 0 : index
    %8 = vector.load %arg9[%c0_15, %c0_16] : memref<8x8xf32, #tpu.memory_space<vmem>>, vector<8x8xf32>
    %c0_17 = arith.constant 0 : index
    %c0_18 = arith.constant 0 : index
    %9 = vector.load %arg10[%c0_17, %c0_18] : memref<8x8xf32, #tpu.memory_space<vmem>>, vector<8x8xf32>
    %c0_19 = arith.constant 0 : index
    %c0_20 = arith.constant 0 : index
    %10 = vector.load %arg11[%c0_19, %c0_20] : memref<8x8xf32, #tpu.memory_space<vmem>>, vector<8x8xf32>
    %c0_21 = arith.constant 0 : index
    %c0_22 = arith.constant 0 : index
    %11 = vector.load %arg12[%c0_21, %c0_22] : memref<8x8xf32, #tpu.memory_space<vmem>>, vector<8x8xf32>
    %c0_23 = arith.constant 0 : index
    %c0_24 = arith.constant 0 : index
    %12 = vector.load %arg13[%c0_23, %c0_24] : memref<8x8xf32, #tpu.memory_space<vmem>>, vector<8x8xf32>
    %c0_25 = arith.constant 0 : index
    %c0_26 = arith.constant 0 : index
    %13 = vector.load %arg14[%c0_25, %c0_26] : memref<8x8xf32, #tpu.memory_space<vmem>>, vector<8x8xf32>
    %cst = arith.constant 0.000000e+00 : f32
    %14 = vector.broadcast %cst : f32 to vector<32x12xf32>
    %15 = arith.maximumf %0, %14 : vector<32x12xf32>
    %cst_27 = arith.constant dense<0.000000e+00> : vector<32x8xf32>
    %16 = tpu.matmul %15, %4, %cst_27 {dimension_numbers = #tpu.dot_dimension_numbers<[1], [0], [0], [1], [0, 0, 1, 1], [], []>} : vector<32x12xf32>, vector<12x8xf32>, vector<32x8xf32> -> vector<32x8xf32>
    %cst_28 = arith.constant 0.000000e+00 : f32
    %17 = vector.broadcast %cst_28 : f32 to vector<32x12xf32>
    %18 = arith.maximumf %1, %17 : vector<32x12xf32>
    %cst_29 = arith.constant dense<0.000000e+00> : vector<32x8xf32>
    %19 = tpu.matmul %18, %4, %cst_29 {dimension_numbers = #tpu.dot_dimension_numbers<[1], [0], [0], [1], [0, 0, 1, 1], [], []>} : vector<32x12xf32>, vector<12x8xf32>, vector<32x8xf32> -> vector<32x8xf32>
    %cst_30 = arith.constant 0.000000e+00 : f32
    %20 = vector.broadcast %cst_30 : f32 to vector<32x16xf32>
    %21 = arith.maximumf %2, %20 : vector<32x16xf32>
    %cst_31 = arith.constant dense<0.000000e+00> : vector<32x8xf32>
    %22 = tpu.matmul %21, %5, %cst_31 {dimension_numbers = #tpu.dot_dimension_numbers<[1], [0], [0], [1], [0, 0, 1, 1], [], []>} : vector<32x16xf32>, vector<16x8xf32>, vector<32x8xf32> -> vector<32x8xf32>
    %cst_32 = arith.constant 0.000000e+00 : f32
    %23 = vector.broadcast %cst_32 : f32 to vector<32x16xf32>
    %24 = arith.maximumf %3, %23 : vector<32x16xf32>
    %cst_33 = arith.constant dense<0.000000e+00> : vector<32x8xf32>
    %25 = tpu.matmul %24, %5, %cst_33 {dimension_numbers = #tpu.dot_dimension_numbers<[1], [0], [0], [1], [0, 0, 1, 1], [], []>} : vector<32x16xf32>, vector<16x8xf32>, vector<32x8xf32> -> vector<32x8xf32>
    %cst_34 = arith.constant 0.000000e+00 : f32
    %26 = vector.broadcast %cst_34 : f32 to vector<32x8xf32>
    %27 = arith.maximumf %16, %26 : vector<32x8xf32>
    %cst_35 = arith.constant dense<0.000000e+00> : vector<32x8xf32>
    %28 = tpu.matmul %27, %6, %cst_35 {dimension_numbers = #tpu.dot_dimension_numbers<[1], [0], [0], [1], [0, 0, 1, 1], [], []>} : vector<32x8xf32>, vector<8x8xf32>, vector<32x8xf32> -> vector<32x8xf32>
    %cst_36 = arith.constant 0.000000e+00 : f32
    %29 = vector.broadcast %cst_36 : f32 to vector<32x8xf32>
    %30 = arith.maximumf %19, %29 : vector<32x8xf32>
    %cst_37 = arith.constant dense<0.000000e+00> : vector<32x8xf32>
    %31 = tpu.matmul %30, %7, %cst_37 {dimension_numbers = #tpu.dot_dimension_numbers<[1], [0], [0], [1], [0, 0, 1, 1], [], []>} : vector<32x8xf32>, vector<8x8xf32>, vector<32x8xf32> -> vector<32x8xf32>
    %32 = arith.addf %28, %31 : vector<32x8xf32>
    %cst_38 = arith.constant 0.000000e+00 : f32
    %33 = vector.broadcast %cst_38 : f32 to vector<32x8xf32>
    %34 = arith.maximumf %22, %33 : vector<32x8xf32>
    %cst_39 = arith.constant dense<0.000000e+00> : vector<32x8xf32>
    %35 = tpu.matmul %34, %8, %cst_39 {dimension_numbers = #tpu.dot_dimension_numbers<[1], [0], [0], [1], [0, 0, 1, 1], [], []>} : vector<32x8xf32>, vector<8x8xf32>, vector<32x8xf32> -> vector<32x8xf32>
    %cst_40 = arith.constant 0.000000e+00 : f32
    %36 = vector.broadcast %cst_40 : f32 to vector<32x8xf32>
    %37 = arith.maximumf %25, %36 : vector<32x8xf32>
    %cst_41 = arith.constant dense<0.000000e+00> : vector<32x8xf32>
    %38 = tpu.matmul %37, %9, %cst_41 {dimension_numbers = #tpu.dot_dimension_numbers<[1], [0], [0], [1], [0, 0, 1, 1], [], []>} : vector<32x8xf32>, vector<8x8xf32>, vector<32x8xf32> -> vector<32x8xf32>
    %39 = arith.addf %35, %38 : vector<32x8xf32>
    %40 = arith.addf %32, %39 : vector<32x8xf32>
    %cst_42 = arith.constant 0.000000e+00 : f32
    %41 = vector.broadcast %cst_42 : f32 to vector<32x8xf32>
    %42 = arith.maximumf %22, %41 : vector<32x8xf32>
    %cst_43 = arith.constant dense<0.000000e+00> : vector<32x8xf32>
    %43 = tpu.matmul %42, %10, %cst_43 {dimension_numbers = #tpu.dot_dimension_numbers<[1], [0], [0], [1], [0, 0, 1, 1], [], []>} : vector<32x8xf32>, vector<8x8xf32>, vector<32x8xf32> -> vector<32x8xf32>
    %cst_44 = arith.constant 0.000000e+00 : f32
    %44 = vector.broadcast %cst_44 : f32 to vector<32x8xf32>
    %45 = arith.maximumf %25, %44 : vector<32x8xf32>
    %cst_45 = arith.constant dense<0.000000e+00> : vector<32x8xf32>
    %46 = tpu.matmul %45, %11, %cst_45 {dimension_numbers = #tpu.dot_dimension_numbers<[1], [0], [0], [1], [0, 0, 1, 1], [], []>} : vector<32x8xf32>, vector<8x8xf32>, vector<32x8xf32> -> vector<32x8xf32>
    %47 = arith.addf %43, %46 : vector<32x8xf32>
    %48 = arith.addf %47, %40 : vector<32x8xf32>
    %cst_46 = arith.constant 0.000000e+00 : f32
    %49 = vector.broadcast %cst_46 : f32 to vector<32x8xf32>
    %50 = arith.maximumf %16, %49 : vector<32x8xf32>
    %cst_47 = arith.constant dense<0.000000e+00> : vector<32x8xf32>
    %51 = tpu.matmul %50, %12, %cst_47 {dimension_numbers = #tpu.dot_dimension_numbers<[1], [0], [0], [1], [0, 0, 1, 1], [], []>} : vector<32x8xf32>, vector<8x8xf32>, vector<32x8xf32> -> vector<32x8xf32>
    %cst_48 = arith.constant 0.000000e+00 : f32
    %52 = vector.broadcast %cst_48 : f32 to vector<32x8xf32>
    %53 = arith.maximumf %19, %52 : vector<32x8xf32>
    %cst_49 = arith.constant dense<0.000000e+00> : vector<32x8xf32>
    %54 = tpu.matmul %53, %13, %cst_49 {dimension_numbers = #tpu.dot_dimension_numbers<[1], [0], [0], [1], [0, 0, 1, 1], [], []>} : vector<32x8xf32>, vector<8x8xf32>, vector<32x8xf32> -> vector<32x8xf32>
    %55 = arith.addf %51, %54 : vector<32x8xf32>
    %56 = arith.addf %55, %40 : vector<32x8xf32>
    %57 = arith.addf %40, %48 : vector<32x8xf32>
    %c0_50 = arith.constant 0 : index
    %c0_51 = arith.constant 0 : index
    %c0_52 = arith.constant 0 : index
    %58 = vector.load %arg15[%c0_50, %c0_51, %c0_52] : memref<4x32x8xf32, #tpu.memory_space<vmem>>, vector<1x32x8xf32>
    %59 = vector.shape_cast %58 : vector<1x32x8xf32> to vector<32x8xf32>
    %60 = vector.shape_cast %40 : vector<32x8xf32> to vector<1x32x8xf32>
    tpu.vector_store %arg15[%c0_50, %c0_51, %c0_52], %60 {strides = array<i32>} : memref<4x32x8xf32, #tpu.memory_space<vmem>>, vector<1x32x8xf32>,
    %c1 = arith.constant 1 : index
    %c0_53 = arith.constant 0 : index
    %c0_54 = arith.constant 0 : index
    %61 = vector.load %arg15[%c1, %c0_53, %c0_54] : memref<4x32x8xf32, #tpu.memory_space<vmem>>, vector<1x32x8xf32>
    %62 = vector.shape_cast %61 : vector<1x32x8xf32> to vector<32x8xf32>
    %63 = vector.shape_cast %48 : vector<32x8xf32> to vector<1x32x8xf32>
    tpu.vector_store %arg15[%c1, %c0_53, %c0_54], %63 {strides = array<i32>} : memref<4x32x8xf32, #tpu.memory_space<vmem>>, vector<1x32x8xf32>,
    %c2 = arith.constant 2 : index
    %c0_55 = arith.constant 0 : index
    %c0_56 = arith.constant 0 : index
    %64 = vector.load %arg15[%c2, %c0_55, %c0_56] : memref<4x32x8xf32, #tpu.memory_space<vmem>>, vector<1x32x8xf32>
    %65 = vector.shape_cast %64 : vector<1x32x8xf32> to vector<32x8xf32>
    %66 = vector.shape_cast %56 : vector<32x8xf32> to vector<1x32x8xf32>
    tpu.vector_store %arg15[%c2, %c0_55, %c0_56], %66 {strides = array<i32>} : memref<4x32x8xf32, #tpu.memory_space<vmem>>, vector<1x32x8xf32>,
    %c3 = arith.constant 3 : index
    %c0_57 = arith.constant 0 : index
    %c0_58 = arith.constant 0 : index
    %67 = vector.load %arg15[%c3, %c0_57, %c0_58] : memref<4x32x8xf32, #tpu.memory_space<vmem>>, vector<1x32x8xf32>
    %68 = vector.shape_cast %67 : vector<1x32x8xf32> to vector<32x8xf32>
    %69 = vector.shape_cast %57 : vector<32x8xf32> to vector<1x32x8xf32>
    tpu.vector_store %arg15[%c3, %c0_57, %c0_58], %69 {strides = array<i32>} : memref<4x32x8xf32, #tpu.memory_space<vmem>>, vector<1x32x8xf32>,
    return
  }
  func.func @transform_0(%arg0: i32) -> (i32, i32) {
    %c0_i32 = arith.constant 0 : i32
    %c0_i32_0 = arith.constant 0 : i32
    %c0_i32_1 = arith.constant 0 : i32
    return %c0_i32, %c0_i32_0 : i32, i32
  }
  func.func @transform_1(%arg0: i32) -> (i32, i32) {
    %c0_i32 = arith.constant 0 : i32
    %c0_i32_0 = arith.constant 0 : i32
    %c0_i32_1 = arith.constant 0 : i32
    return %c0_i32, %c0_i32_0 : i32, i32
  }
  func.func @transform_2(%arg0: i32) -> (i32, i32) {
    %c0_i32 = arith.constant 0 : i32
    %c0_i32_0 = arith.constant 0 : i32
    %c0_i32_1 = arith.constant 0 : i32
    return %c0_i32, %c0_i32_0 : i32, i32
  }
  func.func @transform_3(%arg0: i32) -> (i32, i32) {
    %c0_i32 = arith.constant 0 : i32
    %c0_i32_0 = arith.constant 0 : i32
    %c0_i32_1 = arith.constant 0 : i32
    return %c0_i32, %c0_i32_0 : i32, i32
  }
  func.func @transform_4(%arg0: i32) -> (i32, i32) {
    %c0_i32 = arith.constant 0 : i32
    %c0_i32_0 = arith.constant 0 : i32
    %c0_i32_1 = arith.constant 0 : i32
    return %c0_i32, %c0_i32_0 : i32, i32
  }
  func.func @transform_5(%arg0: i32) -> (i32, i32) {
    %c0_i32 = arith.constant 0 : i32
    %c0_i32_0 = arith.constant 0 : i32
    %c0_i32_1 = arith.constant 0 : i32
    return %c0_i32, %c0_i32_0 : i32, i32
  }
  func.func @transform_6(%arg0: i32) -> (i32, i32) {
    %c0_i32 = arith.constant 0 : i32
    %c0_i32_0 = arith.constant 0 : i32
    %c0_i32_1 = arith.constant 0 : i32
    return %c0_i32, %c0_i32_0 : i32, i32
  }
  func.func @transform_7(%arg0: i32) -> (i32, i32) {
    %c0_i32 = arith.constant 0 : i32
    %c0_i32_0 = arith.constant 0 : i32
    %c0_i32_1 = arith.constant 0 : i32
    return %c0_i32, %c0_i32_0 : i32, i32
  }
  func.func @transform_8(%arg0: i32) -> (i32, i32) {
    %c0_i32 = arith.constant 0 : i32
    %c0_i32_0 = arith.constant 0 : i32
    %c0_i32_1 = arith.constant 0 : i32
    return %c0_i32, %c0_i32_0 : i32, i32
  }
  func.func @transform_9(%arg0: i32) -> (i32, i32) {
    %c0_i32 = arith.constant 0 : i32
    %c0_i32_0 = arith.constant 0 : i32
    %c0_i32_1 = arith.constant 0 : i32
    return %c0_i32, %c0_i32_0 : i32, i32
  }
  func.func @transform_10(%arg0: i32) -> (i32, i32) {
    %c0_i32 = arith.constant 0 : i32
    %c0_i32_0 = arith.constant 0 : i32
    %c0_i32_1 = arith.constant 0 : i32
    return %c0_i32, %c0_i32_0 : i32, i32
  }
  func.func @transform_11(%arg0: i32) -> (i32, i32) {
    %c0_i32 = arith.constant 0 : i32
    %c0_i32_0 = arith.constant 0 : i32
    %c0_i32_1 = arith.constant 0 : i32
    return %c0_i32, %c0_i32_0 : i32, i32
  }
  func.func @transform_12(%arg0: i32) -> (i32, i32) {
    %c0_i32 = arith.constant 0 : i32
    %c0_i32_0 = arith.constant 0 : i32
    %c0_i32_1 = arith.constant 0 : i32
    return %c0_i32, %c0_i32_0 : i32, i32
  }
  func.func @transform_13(%arg0: i32) -> (i32, i32) {
    %c0_i32 = arith.constant 0 : i32
    %c0_i32_0 = arith.constant 0 : i32
    %c0_i32_1 = arith.constant 0 : i32
    return %c0_i32, %c0_i32_0 : i32, i32
  }
  func.func @transform_14(%arg0: i32) -> (i32, i32, i32) {
    %c0_i32 = arith.constant 0 : i32
    %c0_i32_0 = arith.constant 0 : i32
    %c0_i32_1 = arith.constant 0 : i32
    %c0_i32_2 = arith.constant 0 : i32
    return %c0_i32, %c0_i32_0, %c0_i32_1 : i32, i32, i32
  }
}

module attributes {stable_mosaic.version = 11 : i64} {
  func.func @kernel(%arg0: i32, %arg1: memref<32x16xf32, #tpu.memory_space<vmem>>, %arg2: memref<32x16xf32, #tpu.memory_space<vmem>>, %arg3: memref<32x32xf32, #tpu.memory_space<vmem>>, %arg4: memref<16x8xf32, #tpu.memory_space<vmem>>, %arg5: memref<16x8xf32, #tpu.memory_space<vmem>>, %arg6: memref<32x8xf32, #tpu.memory_space<vmem>>, %arg7: memref<4x32x8xf32, #tpu.memory_space<vmem>>) attributes {dimension_semantics = [#tpu.dimension_semantics<arbitrary>], iteration_bounds = array<i64: 1>, scalar_prefetch = 0 : i64, scratch_operands = 0 : i64, tpu.core_type = #tpu.core_type<tc>, window_params = [{pipeline_mode = #tpu.pipeline_mode<synchronous>, transform_indices = @transform_0, window_bounds = array<i64: 32, 16>}, {pipeline_mode = #tpu.pipeline_mode<synchronous>, transform_indices = @transform_1, window_bounds = array<i64: 32, 16>}, {pipeline_mode = #tpu.pipeline_mode<synchronous>, transform_indices = @transform_2, window_bounds = array<i64: 32, 32>}, {pipeline_mode = #tpu.pipeline_mode<synchronous>, transform_indices = @transform_3, window_bounds = array<i64: 16, 8>}, {pipeline_mode = #tpu.pipeline_mode<synchronous>, transform_indices = @transform_4, window_bounds = array<i64: 16, 8>}, {pipeline_mode = #tpu.pipeline_mode<synchronous>, transform_indices = @transform_5, window_bounds = array<i64: 32, 8>}, {pipeline_mode = #tpu.pipeline_mode<synchronous>, transform_indices = @transform_6, window_bounds = array<i64: 4, 32, 8>}]} {
    %c0 = arith.constant 0 : index
    %c0_0 = arith.constant 0 : index
    %0 = vector.load %arg1[%c0, %c0_0] : memref<32x16xf32, #tpu.memory_space<vmem>>, vector<32x16xf32>
    %c0_1 = arith.constant 0 : index
    %c0_2 = arith.constant 0 : index
    %1 = vector.load %arg2[%c0_1, %c0_2] : memref<32x16xf32, #tpu.memory_space<vmem>>, vector<32x16xf32>
    %c0_3 = arith.constant 0 : index
    %c0_4 = arith.constant 0 : index
    %2 = vector.load %arg3[%c0_3, %c0_4] : memref<32x32xf32, #tpu.memory_space<vmem>>, vector<32x32xf32>
    %c0_5 = arith.constant 0 : index
    %c0_6 = arith.constant 0 : index
    %3 = vector.load %arg4[%c0_5, %c0_6] : memref<16x8xf32, #tpu.memory_space<vmem>>, vector<16x8xf32>
    %c0_7 = arith.constant 0 : index
    %c0_8 = arith.constant 0 : index
    %4 = vector.load %arg5[%c0_7, %c0_8] : memref<16x8xf32, #tpu.memory_space<vmem>>, vector<16x8xf32>
    %c0_9 = arith.constant 0 : index
    %c0_10 = arith.constant 0 : index
    %5 = vector.load %arg6[%c0_9, %c0_10] : memref<32x8xf32, #tpu.memory_space<vmem>>, vector<32x8xf32>
    %cst = arith.constant 0.000000e+00 : f32
    %6 = vector.broadcast %cst : f32 to vector<32x16xf32>
    %7 = arith.maximumf %0, %6 : vector<32x16xf32>
    %cst_11 = arith.constant dense<0.000000e+00> : vector<32x8xf32>
    %8 = tpu.matmul %7, %3, %cst_11 {dimension_numbers = #tpu.dot_dimension_numbers<[1], [0], [0], [1], [0, 0, 1, 1], [], []>} : vector<32x16xf32>, vector<16x8xf32>, vector<32x8xf32> -> vector<32x8xf32>
    %cst_12 = arith.constant 0.000000e+00 : f32
    %9 = vector.broadcast %cst_12 : f32 to vector<32x16xf32>
    %10 = arith.maximumf %1, %9 : vector<32x16xf32>
    %cst_13 = arith.constant dense<0.000000e+00> : vector<32x8xf32>
    %11 = tpu.matmul %10, %4, %cst_13 {dimension_numbers = #tpu.dot_dimension_numbers<[1], [0], [0], [1], [0, 0, 1, 1], [], []>} : vector<32x16xf32>, vector<16x8xf32>, vector<32x8xf32> -> vector<32x8xf32>
    %12 = arith.addf %8, %11 : vector<32x8xf32>
    %cst_14 = arith.constant 0.000000e+00 : f32
    %13 = vector.broadcast %cst_14 : f32 to vector<32x32xf32>
    %14 = arith.maximumf %2, %13 : vector<32x32xf32>
    %cst_15 = arith.constant dense<0.000000e+00> : vector<32x8xf32>
    %15 = tpu.matmul %14, %5, %cst_15 {dimension_numbers = #tpu.dot_dimension_numbers<[1], [0], [0], [1], [0, 0, 1, 1], [], []>} : vector<32x32xf32>, vector<32x8xf32>, vector<32x8xf32> -> vector<32x8xf32>
    %16 = arith.addf %12, %15 : vector<32x8xf32>
    %17 = arith.addf %15, %16 : vector<32x8xf32>
    %18 = arith.addf %12, %16 : vector<32x8xf32>
    %19 = arith.addf %16, %17 : vector<32x8xf32>
    %c0_16 = arith.constant 0 : index
    %c0_17 = arith.constant 0 : index
    %c0_18 = arith.constant 0 : index
    %20 = vector.load %arg7[%c0_16, %c0_17, %c0_18] : memref<4x32x8xf32, #tpu.memory_space<vmem>>, vector<1x32x8xf32>
    %21 = vector.shape_cast %20 : vector<1x32x8xf32> to vector<32x8xf32>
    %22 = vector.shape_cast %16 : vector<32x8xf32> to vector<1x32x8xf32>
    tpu.vector_store %arg7[%c0_16, %c0_17, %c0_18], %22 {strides = array<i32>} : memref<4x32x8xf32, #tpu.memory_space<vmem>>, vector<1x32x8xf32>,
    %c1 = arith.constant 1 : index
    %c0_19 = arith.constant 0 : index
    %c0_20 = arith.constant 0 : index
    %23 = vector.load %arg7[%c1, %c0_19, %c0_20] : memref<4x32x8xf32, #tpu.memory_space<vmem>>, vector<1x32x8xf32>
    %24 = vector.shape_cast %23 : vector<1x32x8xf32> to vector<32x8xf32>
    %25 = vector.shape_cast %17 : vector<32x8xf32> to vector<1x32x8xf32>
    tpu.vector_store %arg7[%c1, %c0_19, %c0_20], %25 {strides = array<i32>} : memref<4x32x8xf32, #tpu.memory_space<vmem>>, vector<1x32x8xf32>,
    %c2 = arith.constant 2 : index
    %c0_21 = arith.constant 0 : index
    %c0_22 = arith.constant 0 : index
    %26 = vector.load %arg7[%c2, %c0_21, %c0_22] : memref<4x32x8xf32, #tpu.memory_space<vmem>>, vector<1x32x8xf32>
    %27 = vector.shape_cast %26 : vector<1x32x8xf32> to vector<32x8xf32>
    %28 = vector.shape_cast %18 : vector<32x8xf32> to vector<1x32x8xf32>
    tpu.vector_store %arg7[%c2, %c0_21, %c0_22], %28 {strides = array<i32>} : memref<4x32x8xf32, #tpu.memory_space<vmem>>, vector<1x32x8xf32>,
    %c3 = arith.constant 3 : index
    %c0_23 = arith.constant 0 : index
    %c0_24 = arith.constant 0 : index
    %29 = vector.load %arg7[%c3, %c0_23, %c0_24] : memref<4x32x8xf32, #tpu.memory_space<vmem>>, vector<1x32x8xf32>
    %30 = vector.shape_cast %29 : vector<1x32x8xf32> to vector<32x8xf32>
    %31 = vector.shape_cast %19 : vector<32x8xf32> to vector<1x32x8xf32>
    tpu.vector_store %arg7[%c3, %c0_23, %c0_24], %31 {strides = array<i32>} : memref<4x32x8xf32, #tpu.memory_space<vmem>>, vector<1x32x8xf32>,
    return
  }
  func.func @transform_0(%arg0: i32) -> (i32, i32) {
    %c0_i32 = arith.constant 0 : i32
    %c0_i32_0 = arith.constant 0 : i32
    %c0_i32_1 = arith.constant 0 : i32
    return %c0_i32, %c0_i32_0 : i32, i32
  }
  func.func @transform_1(%arg0: i32) -> (i32, i32) {
    %c0_i32 = arith.constant 0 : i32
    %c0_i32_0 = arith.constant 0 : i32
    %c0_i32_1 = arith.constant 0 : i32
    return %c0_i32, %c0_i32_0 : i32, i32
  }
  func.func @transform_2(%arg0: i32) -> (i32, i32) {
    %c0_i32 = arith.constant 0 : i32
    %c0_i32_0 = arith.constant 0 : i32
    %c0_i32_1 = arith.constant 0 : i32
    return %c0_i32, %c0_i32_0 : i32, i32
  }
  func.func @transform_3(%arg0: i32) -> (i32, i32) {
    %c0_i32 = arith.constant 0 : i32
    %c0_i32_0 = arith.constant 0 : i32
    %c0_i32_1 = arith.constant 0 : i32
    return %c0_i32, %c0_i32_0 : i32, i32
  }
  func.func @transform_4(%arg0: i32) -> (i32, i32) {
    %c0_i32 = arith.constant 0 : i32
    %c0_i32_0 = arith.constant 0 : i32
    %c0_i32_1 = arith.constant 0 : i32
    return %c0_i32, %c0_i32_0 : i32, i32
  }
  func.func @transform_5(%arg0: i32) -> (i32, i32) {
    %c0_i32 = arith.constant 0 : i32
    %c0_i32_0 = arith.constant 0 : i32
    %c0_i32_1 = arith.constant 0 : i32
    return %c0_i32, %c0_i32_0 : i32, i32
  }
  func.func @transform_6(%arg0: i32) -> (i32, i32, i32) {
    %c0_i32 = arith.constant 0 : i32
    %c0_i32_0 = arith.constant 0 : i32
    %c0_i32_1 = arith.constant 0 : i32
    %c0_i32_2 = arith.constant 0 : i32
    return %c0_i32, %c0_i32_0, %c0_i32_1 : i32, i32, i32
  }
}

module attributes {stable_mosaic.version = 11 : i64} {
  func.func @kernel(%arg0: i32, %arg1: memref<8x512xf32, #tpu.memory_space<vmem>>, %arg2: memref<512x32xf32, #tpu.memory_space<vmem>>, %arg3: memref<1x32xf32, #tpu.memory_space<vmem>>, %arg4: memref<32x16xf32, #tpu.memory_space<vmem>>, %arg5: memref<1x16xf32, #tpu.memory_space<vmem>>, %arg6: memref<16x10xf32, #tpu.memory_space<vmem>>, %arg7: memref<1x10xf32, #tpu.memory_space<vmem>>, %arg8: memref<8x10xf32, #tpu.memory_space<vmem>>) attributes {dimension_semantics = [#tpu.dimension_semantics<arbitrary>], iteration_bounds = array<i64: 1>, scalar_prefetch = 0 : i64, scratch_operands = 0 : i64, tpu.core_type = #tpu.core_type<tc>, window_params = [{pipeline_mode = #tpu.pipeline_mode<synchronous>, transform_indices = @transform_0, window_bounds = array<i64: 8, 512>}, {pipeline_mode = #tpu.pipeline_mode<synchronous>, transform_indices = @transform_1, window_bounds = array<i64: 512, 32>}, {pipeline_mode = #tpu.pipeline_mode<synchronous>, transform_indices = @transform_2, window_bounds = array<i64: 1, 32>}, {pipeline_mode = #tpu.pipeline_mode<synchronous>, transform_indices = @transform_3, window_bounds = array<i64: 32, 16>}, {pipeline_mode = #tpu.pipeline_mode<synchronous>, transform_indices = @transform_4, window_bounds = array<i64: 1, 16>}, {pipeline_mode = #tpu.pipeline_mode<synchronous>, transform_indices = @transform_5, window_bounds = array<i64: 16, 10>}, {pipeline_mode = #tpu.pipeline_mode<synchronous>, transform_indices = @transform_6, window_bounds = array<i64: 1, 10>}, {pipeline_mode = #tpu.pipeline_mode<synchronous>, transform_indices = @transform_7, window_bounds = array<i64: 8, 10>}]} {
    %c0 = arith.constant 0 : index
    %c0_0 = arith.constant 0 : index
    %0 = vector.load %arg1[%c0, %c0_0] : memref<8x512xf32, #tpu.memory_space<vmem>>, vector<8x512xf32>
    %c0_1 = arith.constant 0 : index
    %c0_2 = arith.constant 0 : index
    %1 = vector.load %arg2[%c0_1, %c0_2] : memref<512x32xf32, #tpu.memory_space<vmem>>, vector<512x32xf32>
    %c0_3 = arith.constant 0 : index
    %c0_4 = arith.constant 0 : index
    %2 = vector.load %arg3[%c0_3, %c0_4] : memref<1x32xf32, #tpu.memory_space<vmem>>, vector<1x32xf32>
    %cst = arith.constant dense<0.000000e+00> : vector<8x32xf32>
    %3 = tpu.matmul %0, %1, %cst {dimension_numbers = #tpu.dot_dimension_numbers<[1], [0], [0], [1], [0, 0, 1, 1], [], []>} : vector<8x512xf32>, vector<512x32xf32>, vector<8x32xf32> -> vector<8x32xf32>
    %4 = vector.broadcast %2 : vector<1x32xf32> to vector<8x32xf32>
    %5 = arith.addf %3, %4 : vector<8x32xf32>
    %cst_5 = arith.constant 0.000000e+00 : f32
    %6 = vector.broadcast %cst_5 : f32 to vector<8x32xf32>
    %7 = arith.maximumf %5, %6 : vector<8x32xf32>
    %c0_6 = arith.constant 0 : index
    %c0_7 = arith.constant 0 : index
    %8 = vector.load %arg4[%c0_6, %c0_7] : memref<32x16xf32, #tpu.memory_space<vmem>>, vector<32x16xf32>
    %c0_8 = arith.constant 0 : index
    %c0_9 = arith.constant 0 : index
    %9 = vector.load %arg5[%c0_8, %c0_9] : memref<1x16xf32, #tpu.memory_space<vmem>>, vector<1x16xf32>
    %cst_10 = arith.constant dense<0.000000e+00> : vector<8x16xf32>
    %10 = tpu.matmul %7, %8, %cst_10 {dimension_numbers = #tpu.dot_dimension_numbers<[1], [0], [0], [1], [0, 0, 1, 1], [], []>} : vector<8x32xf32>, vector<32x16xf32>, vector<8x16xf32> -> vector<8x16xf32>
    %11 = vector.broadcast %9 : vector<1x16xf32> to vector<8x16xf32>
    %12 = arith.addf %10, %11 : vector<8x16xf32>
    %cst_11 = arith.constant 0.000000e+00 : f32
    %13 = vector.broadcast %cst_11 : f32 to vector<8x16xf32>
    %14 = arith.maximumf %12, %13 : vector<8x16xf32>
    %c0_12 = arith.constant 0 : index
    %c0_13 = arith.constant 0 : index
    %15 = vector.load %arg6[%c0_12, %c0_13] : memref<16x10xf32, #tpu.memory_space<vmem>>, vector<16x10xf32>
    %c0_14 = arith.constant 0 : index
    %c0_15 = arith.constant 0 : index
    %16 = vector.load %arg7[%c0_14, %c0_15] : memref<1x10xf32, #tpu.memory_space<vmem>>, vector<1x10xf32>
    %cst_16 = arith.constant dense<0.000000e+00> : vector<8x10xf32>
    %17 = tpu.matmul %14, %15, %cst_16 {dimension_numbers = #tpu.dot_dimension_numbers<[1], [0], [0], [1], [0, 0, 1, 1], [], []>} : vector<8x16xf32>, vector<16x10xf32>, vector<8x10xf32> -> vector<8x10xf32>
    %18 = vector.broadcast %16 : vector<1x10xf32> to vector<8x10xf32>
    %19 = arith.addf %17, %18 : vector<8x10xf32>
    %c0_17 = arith.constant 0 : index
    %c0_18 = arith.constant 0 : index
    %20 = vector.load %arg8[%c0_17, %c0_18] : memref<8x10xf32, #tpu.memory_space<vmem>>, vector<8x10xf32>
    tpu.vector_store %arg8[%c0_17, %c0_18], %19 {strides = array<i32>} : memref<8x10xf32, #tpu.memory_space<vmem>>, vector<8x10xf32>,
    return
  }
  func.func @transform_0(%arg0: i32) -> (i32, i32) {
    %c0_i32 = arith.constant 0 : i32
    %c0_i32_0 = arith.constant 0 : i32
    %c0_i32_1 = arith.constant 0 : i32
    return %c0_i32, %c0_i32_0 : i32, i32
  }
  func.func @transform_1(%arg0: i32) -> (i32, i32) {
    %c0_i32 = arith.constant 0 : i32
    %c0_i32_0 = arith.constant 0 : i32
    %c0_i32_1 = arith.constant 0 : i32
    return %c0_i32, %c0_i32_0 : i32, i32
  }
  func.func @transform_2(%arg0: i32) -> (i32, i32) {
    %c0_i32 = arith.constant 0 : i32
    %c0_i32_0 = arith.constant 0 : i32
    %c0_i32_1 = arith.constant 0 : i32
    return %c0_i32, %c0_i32_0 : i32, i32
  }
  func.func @transform_3(%arg0: i32) -> (i32, i32) {
    %c0_i32 = arith.constant 0 : i32
    %c0_i32_0 = arith.constant 0 : i32
    %c0_i32_1 = arith.constant 0 : i32
    return %c0_i32, %c0_i32_0 : i32, i32
  }
  func.func @transform_4(%arg0: i32) -> (i32, i32) {
    %c0_i32 = arith.constant 0 : i32
    %c0_i32_0 = arith.constant 0 : i32
    %c0_i32_1 = arith.constant 0 : i32
    return %c0_i32, %c0_i32_0 : i32, i32
  }
  func.func @transform_5(%arg0: i32) -> (i32, i32) {
    %c0_i32 = arith.constant 0 : i32
    %c0_i32_0 = arith.constant 0 : i32
    %c0_i32_1 = arith.constant 0 : i32
    return %c0_i32, %c0_i32_0 : i32, i32
  }
  func.func @transform_6(%arg0: i32) -> (i32, i32) {
    %c0_i32 = arith.constant 0 : i32
    %c0_i32_0 = arith.constant 0 : i32
    %c0_i32_1 = arith.constant 0 : i32
    return %c0_i32, %c0_i32_0 : i32, i32
  }
  func.func @transform_7(%arg0: i32) -> (i32, i32) {
    %c0_i32 = arith.constant 0 : i32
    %c0_i32_0 = arith.constant 0 : i32
    %c0_i32_1 = arith.constant 0 : i32
    return %c0_i32, %c0_i32_0 : i32, i32
  }
}

</mosaic_0001>

<llo_original>
// kernel: darts_forward.5
$region0: #{darts_forward.5}
  #allocation0 [shape = 'u32[]', space=smem, size = 0x4, offset = 0x4, fixed_abs, tag = 'smem constant byte address 0x4 - core index']
  #allocation1 [shape = 'u32[72,128]{1,0:T(1,128)}', space=vmem, size = 0x9000, scoped, tag = 'internal scratch']
  %s0 = inlined_call_operand.vmem [shape: f32[128,4], index: 0, kind: input, shape index: {}]
  %s1 = inlined_call_operand.vmem [shape: f32[4,12], index: 1, kind: input, shape index: {}]
  %s2 = inlined_call_operand.vmem [shape: f32[128,12], index: 2, kind: output, shape index: {}]
  %s3 = sld [smem:[#allocation0]]
  $region18: #{darts_forward.5} parent=0
    _
  %s5 = ssub.s32 1, %s3
  %s6 = scalar_select 0, %s5, %s3
  // Predicated region
  $region2: #{darts_forward.5} parent=0 // pred_check
    _
  $region3: #{darts_forward.5} parent=0 // pred_check_branch
    %8 = sbr.rel (0) target = $region5
  $region4: #{darts_forward.5} parent=0 // pred_region
    _
  $region5: #{darts_forward.5} parent=0 // pred_fallthru
    _
  // Predicated region
  $region6: #{darts_forward.5} parent=0 // pred_check
    _
  $region7: #{darts_forward.5} parent=0 // pred_check_branch
    %10 = sbr.rel (0) target = $region9
  $region8: #{darts_forward.5} parent=0 // pred_region
    _
  $region9: #{darts_forward.5} parent=0 // pred_fallthru
    _
  %v11 = vld [vmem:[%s0] sm:$0xff]
  %v12 = vld [vmem:[%s0 + $0x8] sm:$0xff]
  %v13 = vld [vmem:[%s0 + $0x10] sm:$0xff]
  %v14 = vld [vmem:[%s0 + $0x18] sm:$0xff]
  %v15 = vld [vmem:[%s0 + $0x20] sm:$0xff]
  %v16 = vld [vmem:[%s0 + $0x28] sm:$0xff]
  %v17 = vld [vmem:[%s0 + $0x30] sm:$0xff]
  %v18 = vld [vmem:[%s0 + $0x38] sm:$0xff]
  %v19 = vld [vmem:[%s0 + $0x40] sm:$0xff]
  %v20 = vld [vmem:[%s0 + $0x48] sm:$0xff]
  %v21 = vld [vmem:[%s0 + $0x50] sm:$0xff]
  %v22 = vld [vmem:[%s0 + $0x58] sm:$0xff]
  %v23 = vld [vmem:[%s0 + $0x60] sm:$0xff]
  %v24 = vld [vmem:[%s0 + $0x68] sm:$0xff]
  %v25 = vld [vmem:[%s0 + $0x70] sm:$0xff]
  %v26 = vld [vmem:[%s0 + $0x78] sm:$0xff]
  %v27 = vld [vmem:[%s1] sm:$0xf]
  %vm28 = vcmask 31744
  %v30 = vsel %vm28, %v11, 0
  %v33 = vsel %vm28, %v12, 0
  %v36 = vsel %vm28, %v13, 0
  %v39 = vsel %vm28, %v14, 0
  %v42 = vsel %vm28, %v15, 0
  %v45 = vsel %vm28, %v16, 0
  %v48 = vsel %vm28, %v17, 0
  %v51 = vsel %vm28, %v18, 0
  %v54 = vsel %vm28, %v19, 0
  %v57 = vsel %vm28, %v20, 0
  %v60 = vsel %vm28, %v21, 0
  %v63 = vsel %vm28, %v22, 0
  %v66 = vsel %vm28, %v23, 0
  %v69 = vsel %vm28, %v24, 0
  %v72 = vsel %vm28, %v25, 0
  %v75 = vsel %vm28, %v26, 0
  %vm77 = vcmask 1043456
  %v79 = vsel %vm77, %v27, 0
  %81 = vmatpush.msra.mxu0 0.0
  %82 = vmatpush.msra.mxu0 0.0
  %83 = vmatpush.msra.mxu0 0.0
  %84 = vmatpush.msra.mxu0 0.0
  %85 = vmatpush.msra.mxu0 0.0
  %86 = vmatpush.msra.mxu0 0.0
  %87 = vmatpush.msra.mxu0 0.0
  %88 = vmatpush.msra.mxu0 0.0
  %89 = vmatpush.msra.mxu0 0.0
  %90 = vmatpush.msra.mxu0 0.0
  %91 = vmatpush.msra.mxu0 0.0
  %92 = vmatpush.msra.mxu0 0.0
  %93 = vmatpush.msra.mxu0 0.0
  %94 = vmatpush.msra.mxu0 0.0
  %95 = vmatpush.msra.mxu0 0.0
  %96 = vmatpush.msra.mxu0 %v79
  %97 = vmatmul.f32.gmra.mxu0 %v30
  %v98 = vpop.f32.mrf.mxu0
  %v99 = vadd.f32 0.0, %v98
  %100 = vmatmul.f32.gmra.mxu0 %v33
  %v101 = vpop.f32.mrf.mxu0
  %v102 = vadd.f32 0.0, %v101
  %103 = vmatmul.f32.gmra.mxu0 %v36
  %v104 = vpop.f32.mrf.mxu0
  %v105 = vadd.f32 0.0, %v104
  %106 = vmatmul.f32.gmra.mxu0 %v39
  %v107 = vpop.f32.mrf.mxu0
  %v108 = vadd.f32 0.0, %v107
  %109 = vmatmul.f32.gmra.mxu0 %v42
  %v110 = vpop.f32.mrf.mxu0
  %v111 = vadd.f32 0.0, %v110
  %112 = vmatmul.f32.gmra.mxu0 %v45
  %v113 = vpop.f32.mrf.mxu0
  %v114 = vadd.f32 0.0, %v113
  %115 = vmatmul.f32.gmra.mxu0 %v48
  %v116 = vpop.f32.mrf.mxu0
  %v117 = vadd.f32 0.0, %v116
  %118 = vmatmul.f32.gmra.mxu0 %v51
  %v119 = vpop.f32.mrf.mxu0
  %v120 = vadd.f32 0.0, %v119
  %121 = vmatmul.f32.gmra.mxu0 %v54
  %v122 = vpop.f32.mrf.mxu0
  %v123 = vadd.f32 0.0, %v122
  %124 = vmatmul.f32.gmra.mxu0 %v57
  %v125 = vpop.f32.mrf.mxu0
  %v126 = vadd.f32 0.0, %v125
  %127 = vmatmul.f32.gmra.mxu0 %v60
  %v128 = vpop.f32.mrf.mxu0
  %v129 = vadd.f32 0.0, %v128
  %130 = vmatmul.f32.gmra.mxu0 %v63
  %v131 = vpop.f32.mrf.mxu0
  %v132 = vadd.f32 0.0, %v131
  %133 = vmatmul.f32.gmra.mxu0 %v66
  %v134 = vpop.f32.mrf.mxu0
  %v135 = vadd.f32 0.0, %v134
  %136 = vmatmul.f32.gmra.mxu0 %v69
  %v137 = vpop.f32.mrf.mxu0
  %v138 = vadd.f32 0.0, %v137
  %139 = vmatmul.f32.gmra.mxu0 %v72
  %v140 = vpop.f32.mrf.mxu0
  %v141 = vadd.f32 0.0, %v140
  %142 = vmatmul.f32.gmra.mxu0 %v75
  %v143 = vpop.f32.mrf.mxu0
  %v144 = vadd.f32 0.0, %v143
  %145 = vdwg.mxu0
  %v146 = vmax.f32 %v99, 0.0
  %v147 = vmax.f32 %v102, 0.0
  %v148 = vmax.f32 %v105, 0.0
  %v149 = vmax.f32 %v108, 0.0
  %v150 = vmax.f32 %v111, 0.0
  %v151 = vmax.f32 %v114, 0.0
  %v152 = vmax.f32 %v117, 0.0
  %v153 = vmax.f32 %v120, 0.0
  %v154 = vmax.f32 %v123, 0.0
  %v155 = vmax.f32 %v126, 0.0
  %v156 = vmax.f32 %v129, 0.0
  %v157 = vmax.f32 %v132, 0.0
  %v158 = vmax.f32 %v135, 0.0
  %v159 = vmax.f32 %v138, 0.0
  %v160 = vmax.f32 %v141, 0.0
  %v161 = vmax.f32 %v144, 0.0
  %vm162 = vcmask 97280
  %163 = vst.msk [vmem:[%s2] sm:$0xff] %vm162, %v146
  %164 = vst.msk [vmem:[%s2 + $0x8] sm:$0xff] %vm162, %v147
  %165 = vst.msk [vmem:[%s2 + $0x10] sm:$0xff] %vm162, %v148
  %166 = vst.msk [vmem:[%s2 + $0x18] sm:$0xff] %vm162, %v149
  %167 = vst.msk [vmem:[%s2 + $0x20] sm:$0xff] %vm162, %v150
  %168 = vst.msk [vmem:[%s2 + $0x28] sm:$0xff] %vm162, %v151
  %169 = vst.msk [vmem:[%s2 + $0x30] sm:$0xff] %vm162, %v152
  %170 = vst.msk [vmem:[%s2 + $0x38] sm:$0xff] %vm162, %v153
  %171 = vst.msk [vmem:[%s2 + $0x40] sm:$0xff] %vm162, %v154
  %172 = vst.msk [vmem:[%s2 + $0x48] sm:$0xff] %vm162, %v155
  %173 = vst.msk [vmem:[%s2 + $0x50] sm:$0xff] %vm162, %v156
  %174 = vst.msk [vmem:[%s2 + $0x58] sm:$0xff] %vm162, %v157
  %175 = vst.msk [vmem:[%s2 + $0x60] sm:$0xff] %vm162, %v158
  %176 = vst.msk [vmem:[%s2 + $0x68] sm:$0xff] %vm162, %v159
  %177 = vst.msk [vmem:[%s2 + $0x70] sm:$0xff] %vm162, %v160
  %178 = vst.msk [vmem:[%s2 + $0x78] sm:$0xff] %vm162, %v161
  // Predicated region
  $region10: #{darts_forward.5} parent=0 // pred_check
    _
  $region11: #{darts_forward.5} parent=0 // pred_check_branch
    %180 = sbr.rel (0) target = $region13
  $region12: #{darts_forward.5} parent=0 // pred_region
    _
  $region13: #{darts_forward.5} parent=0 // pred_fallthru
    _
  // Predicated region
  $region14: #{darts_forward.5} parent=0 // pred_check
    _
  $region15: #{darts_forward.5} parent=0 // pred_check_branch
    %182 = sbr.rel (0) target = $region17
  $region16: #{darts_forward.5} parent=0 // pred_region
    _
  $region17: #{darts_forward.5} parent=0 // pred_fallthru
    _

// kernel: darts_forward.6
$region0: #{darts_forward.6}
  #allocation0 [shape = 'u32[]', space=smem, size = 0x4, offset = 0x4, fixed_abs, tag = 'smem constant byte address 0x4 - core index']
  #allocation1 [shape = 'u32[72,128]{1,0:T(1,128)}', space=vmem, size = 0x9000, scoped, tag = 'internal scratch']
  %s0 = inlined_call_operand.vmem [shape: f32[128,12], index: 0, kind: input, shape index: {}, may-alias: {0,1}]
  %s1 = inlined_call_operand.vmem [shape: f32[128,12], index: 1, kind: input, shape index: {}, may-alias: {0,1}]
  %s2 = inlined_call_operand.vmem [shape: f32[12,4], index: 2, kind: input, shape index: {}]
  %s3 = inlined_call_operand.vmem [shape: f32[12,4], index: 3, kind: input, shape index: {}]
  %s4 = inlined_call_operand.vmem [shape: f32[4,128,4], index: 4, kind: output, shape index: {}]
  %s5 = sld [smem:[#allocation0]]
  $region26: #{darts_forward.6} parent=0
    _
  %s7 = ssub.s32 1, %s5
  %s8 = scalar_select 0, %s7, %s5
  // Predicated region
  $region2: #{darts_forward.6} parent=0 // pred_check
    _
  $region3: #{darts_forward.6} parent=0 // pred_check_branch
    %10 = sbr.rel (0) target = $region5
  $region4: #{darts_forward.6} parent=0 // pred_region
    _
  $region5: #{darts_forward.6} parent=0 // pred_fallthru
    _
  // Predicated region
  $region6: #{darts_forward.6} parent=0 // pred_check
    _
  $region7: #{darts_forward.6} parent=0 // pred_check_branch
    %12 = sbr.rel (0) target = $region9
  $region8: #{darts_forward.6} parent=0 // pred_region
    _
  $region9: #{darts_forward.6} parent=0 // pred_fallthru
    _
  // Predicated region
  $region10: #{darts_forward.6} parent=0 // pred_check
    _
  $region11: #{darts_forward.6} parent=0 // pred_check_branch
    %14 = sbr.rel (0) target = $region13
  $region12: #{darts_forward.6} parent=0 // pred_region
    _
  $region13: #{darts_forward.6} parent=0 // pred_fallthru
    _
  // Predicated region
  $region14: #{darts_forward.6} parent=0 // pred_check
    _
  $region15: #{darts_forward.6} parent=0 // pred_check_branch
    %16 = sbr.rel (0) target = $region17
  $region16: #{darts_forward.6} parent=0 // pred_region
    _
  $region17: #{darts_forward.6} parent=0 // pred_fallthru
    _
  %v17 = vld [vmem:[%s0] sm:$0xff]
  %v18 = vld [vmem:[%s0 + $0x8] sm:$0xff]
  %v19 = vld [vmem:[%s0 + $0x10] sm:$0xff]
  %v20 = vld [vmem:[%s0 + $0x18] sm:$0xff]
  %v21 = vld [vmem:[%s0 + $0x20] sm:$0xff]
  %v22 = vld [vmem:[%s0 + $0x28] sm:$0xff]
  %v23 = vld [vmem:[%s0 + $0x30] sm:$0xff]
  %v24 = vld [vmem:[%s0 + $0x38] sm:$0xff]
  %v25 = vld [vmem:[%s0 + $0x40] sm:$0xff]
  %v26 = vld [vmem:[%s0 + $0x48] sm:$0xff]
  %v27 = vld [vmem:[%s0 + $0x50] sm:$0xff]
  %v28 = vld [vmem:[%s0 + $0x58] sm:$0xff]
  %v29 = vld [vmem:[%s0 + $0x60] sm:$0xff]
  %v30 = vld [vmem:[%s0 + $0x68] sm:$0xff]
  %v31 = vld [vmem:[%s0 + $0x70] sm:$0xff]
  %v32 = vld [vmem:[%s0 + $0x78] sm:$0xff]
  %v33 = vld [vmem:[%s1] sm:$0xff]
  %v34 = vld [vmem:[%s1 + $0x8] sm:$0xff]
  %v35 = vld [vmem:[%s1 + $0x10] sm:$0xff]
  %v36 = vld [vmem:[%s1 + $0x18] sm:$0xff]
  %v37 = vld [vmem:[%s1 + $0x20] sm:$0xff]
  %v38 = vld [vmem:[%s1 + $0x28] sm:$0xff]
  %v39 = vld [vmem:[%s1 + $0x30] sm:$0xff]
  %v40 = vld [vmem:[%s1 + $0x38] sm:$0xff]
  %v41 = vld [vmem:[%s1 + $0x40] sm:$0xff]
  %v42 = vld [vmem:[%s1 + $0x48] sm:$0xff]
  %v43 = vld [vmem:[%s1 + $0x50] sm:$0xff]
  %v44 = vld [vmem:[%s1 + $0x58] sm:$0xff]
  %v45 = vld [vmem:[%s1 + $0x60] sm:$0xff]
  %v46 = vld [vmem:[%s1 + $0x68] sm:$0xff]
  %v47 = vld [vmem:[%s1 + $0x70] sm:$0xff]
  %v48 = vld [vmem:[%s1 + $0x78] sm:$0xff]
  %v49 = vld [vmem:[%s2] sm:$0xff]
  %v50 = vld [vmem:[%s2 + $0x8] sm:$0xf]
  %v51 = vld [vmem:[%s3] sm:$0xff]
  %v52 = vld [vmem:[%s3 + $0x8] sm:$0xf]
  %v53 = vmax.f32 %v17, 0.0
  %v54 = vmax.f32 %v18, 0.0
  %v55 = vmax.f32 %v19, 0.0
  %v56 = vmax.f32 %v20, 0.0
  %v57 = vmax.f32 %v21, 0.0
  %v58 = vmax.f32 %v22, 0.0
  %v59 = vmax.f32 %v23, 0.0
  %v60 = vmax.f32 %v24, 0.0
  %v61 = vmax.f32 %v25, 0.0
  %v62 = vmax.f32 %v26, 0.0
  %v63 = vmax.f32 %v27, 0.0
  %v64 = vmax.f32 %v28, 0.0
  %v65 = vmax.f32 %v29, 0.0
  %v66 = vmax.f32 %v30, 0.0
  %v67 = vmax.f32 %v31, 0.0
  %v68 = vmax.f32 %v32, 0.0
  %vm69 = vcmask 97280
  %v71 = vsel %vm69, %v53, 0
  %v74 = vsel %vm69, %v54, 0
  %v77 = vsel %vm69, %v55, 0
  %v80 = vsel %vm69, %v56, 0
  %v83 = vsel %vm69, %v57, 0
  %v86 = vsel %vm69, %v58, 0
  %v89 = vsel %vm69, %v59, 0
  %v92 = vsel %vm69, %v60, 0
  %v95 = vsel %vm69, %v61, 0
  %v98 = vsel %vm69, %v62, 0
  %v101 = vsel %vm69, %v63, 0
  %v104 = vsel %vm69, %v64, 0
  %v107 = vsel %vm69, %v65, 0
  %v110 = vsel %vm69, %v66, 0
  %v113 = vsel %vm69, %v67, 0
  %v116 = vsel %vm69, %v68, 0
  %vm118 = vcmask 1043456
  %v120 = vsel %vm118, %v50, 0
  %122 = vmatpush.msra.mxu0 0.0
  %123 = vmatpush.msra.mxu0 0.0
  %124 = vmatpush.msra.mxu0 0.0
  %125 = vmatpush.msra.mxu0 0.0
  %126 = vmatpush.msra.mxu0 0.0
  %127 = vmatpush.msra.mxu0 0.0
  %128 = vmatpush.msra.mxu0 0.0
  %129 = vmatpush.msra.mxu0 0.0
  %130 = vmatpush.msra.mxu0 0.0
  %131 = vmatpush.msra.mxu0 0.0
  %132 = vmatpush.msra.mxu0 0.0
  %133 = vmatpush.msra.mxu0 0.0
  %134 = vmatpush.msra.mxu0 0.0
  %135 = vmatpush.msra.mxu0 0.0
  %136 = vmatpush.msra.mxu0 %v120
  %137 = vmatpush.msra.mxu0 %v49
  %138 = vmatmul.f32.gmra.mxu0 %v71
  %v139 = vpop.f32.mrf.mxu0
  %v140 = vadd.f32 0.0, %v139
  %141 = vmatmul.f32.gmra.mxu0 %v74
  %v142 = vpop.f32.mrf.mxu0
  %v143 = vadd.f32 0.0, %v142
  %144 = vmatmul.f32.gmra.mxu0 %v77
  %v145 = vpop.f32.mrf.mxu0
  %v146 = vadd.f32 0.0, %v145
  %147 = vmatmul.f32.gmra.mxu0 %v80
  %v148 = vpop.f32.mrf.mxu0
  %v149 = vadd.f32 0.0, %v148
  %150 = vmatmul.f32.gmra.mxu0 %v83
  %v151 = vpop.f32.mrf.mxu0
  %v152 = vadd.f32 0.0, %v151
  %153 = vmatmul.f32.gmra.mxu0 %v86
  %v154 = vpop.f32.mrf.mxu0
  %v155 = vadd.f32 0.0, %v154
  %156 = vmatmul.f32.gmra.mxu0 %v89
  %v157 = vpop.f32.mrf.mxu0
  %v158 = vadd.f32 0.0, %v157
  %159 = vmatmul.f32.gmra.mxu0 %v92
  %v160 = vpop.f32.mrf.mxu0
  %v161 = vadd.f32 0.0, %v160
  %162 = vmatmul.f32.gmra.mxu0 %v95
  %v163 = vpop.f32.mrf.mxu0
  %v164 = vadd.f32 0.0, %v163
  %165 = vmatmul.f32.gmra.mxu0 %v98
  %v166 = vpop.f32.mrf.mxu0
  %v167 = vadd.f32 0.0, %v166
  %168 = vmatmul.f32.gmra.mxu0 %v101
  %v169 = vpop.f32.mrf.mxu0
  %v170 = vadd.f32 0.0, %v169
  %171 = vmatmul.f32.gmra.mxu0 %v104
  %v172 = vpop.f32.mrf.mxu0
  %v173 = vadd.f32 0.0, %v172
  %174 = vmatmul.f32.gmra.mxu0 %v107
  %v175 = vpop.f32.mrf.mxu0
  %v176 = vadd.f32 0.0, %v175
  %177 = vmatmul.f32.gmra.mxu0 %v110
  %v178 = vpop.f32.mrf.mxu0
  %v179 = vadd.f32 0.0, %v178
  %180 = vmatmul.f32.gmra.mxu0 %v113
  %v181 = vpop.f32.mrf.mxu0
  %v182 = vadd.f32 0.0, %v181
  %183 = vmatmul.f32.gmra.mxu0 %v116
  %v184 = vpop.f32.mrf.mxu0
  %v185 = vadd.f32 0.0, %v184
  %186 = vdwg.mxu0
  %v187 = vmax.f32 %v33, 0.0
  %v188 = vmax.f32 %v34, 0.0
  %v189 = vmax.f32 %v35, 0.0
  %v190 = vmax.f32 %v36, 0.0
  %v191 = vmax.f32 %v37, 0.0
  %v192 = vmax.f32 %v38, 0.0
  %v193 = vmax.f32 %v39, 0.0
  %v194 = vmax.f32 %v40, 0.0
  %v195 = vmax.f32 %v41, 0.0
  %v196 = vmax.f32 %v42, 0.0
  %v197 = vmax.f32 %v43, 0.0
  %v198 = vmax.f32 %v44, 0.0
  %v199 = vmax.f32 %v45, 0.0
  %v200 = vmax.f32 %v46, 0.0
  %v201 = vmax.f32 %v47, 0.0
  %v202 = vmax.f32 %v48, 0.0
  %v204 = vsel %vm69, %v187, 0
  %v207 = vsel %vm69, %v188, 0
  %v210 = vsel %vm69, %v189, 0
  %v213 = vsel %vm69, %v190, 0
  %v216 = vsel %vm69, %v191, 0
  %v219 = vsel %vm69, %v192, 0
  %v222 = vsel %vm69, %v193, 0
  %v225 = vsel %vm69, %v194, 0
  %v228 = vsel %vm69, %v195, 0
  %v231 = vsel %vm69, %v196, 0
  %v234 = vsel %vm69, %v197, 0
  %v237 = vsel %vm69, %v198, 0
  %v240 = vsel %vm69, %v199, 0
  %v243 = vsel %vm69, %v200, 0
  %v246 = vsel %vm69, %v201, 0
  %v249 = vsel %vm69, %v202, 0
  %v252 = vsel %vm118, %v52, 0
  %254 = vmatpush.msra.mxu0 0.0
  %255 = vmatpush.msra.mxu0 0.0
  %256 = vmatpush.msra.mxu0 0.0
  %257 = vmatpush.msra.mxu0 0.0
  %258 = vmatpush.msra.mxu0 0.0
  %259 = vmatpush.msra.mxu0 0.0
  %260 = vmatpush.msra.mxu0 0.0
  %261 = vmatpush.msra.mxu0 0.0
  %262 = vmatpush.msra.mxu0 0.0
  %263 = vmatpush.msra.mxu0 0.0
  %264 = vmatpush.msra.mxu0 0.0
  %265 = vmatpush.msra.mxu0 0.0
  %266 = vmatpush.msra.mxu0 0.0
  %267 = vmatpush.msra.mxu0 0.0
  %268 = vmatpush.msra.mxu0 %v252
  %269 = vmatpush.msra.mxu0 %v51
  %270 = vmatmul.f32.gmra.mxu0 %v204
  %v271 = vpop.f32.mrf.mxu0
  %v272 = vadd.f32 0.0, %v271
  %273 = vmatmul.f32.gmra.mxu0 %v207
  %v274 = vpop.f32.mrf.mxu0
  %v275 = vadd.f32 0.0, %v274
  %276 = vmatmul.f32.gmra.mxu0 %v210
  %v277 = vpop.f32.mrf.mxu0
  %v278 = vadd.f32 0.0, %v277
  %279 = vmatmul.f32.gmra.mxu0 %v213
  %v280 = vpop.f32.mrf.mxu0
  %v281 = vadd.f32 0.0, %v280
  %282 = vmatmul.f32.gmra.mxu0 %v216
  %v283 = vpop.f32.mrf.mxu0
  %v284 = vadd.f32 0.0, %v283
  %285 = vmatmul.f32.gmra.mxu0 %v219
  %v286 = vpop.f32.mrf.mxu0
  %v287 = vadd.f32 0.0, %v286
  %288 = vmatmul.f32.gmra.mxu0 %v222
  %v289 = vpop.f32.mrf.mxu0
  %v290 = vadd.f32 0.0, %v289
  %291 = vmatmul.f32.gmra.mxu0 %v225
  %v292 = vpop.f32.mrf.mxu0
  %v293 = vadd.f32 0.0, %v292
  %294 = vmatmul.f32.gmra.mxu0 %v228
  %v295 = vpop.f32.mrf.mxu0
  %v296 = vadd.f32 0.0, %v295
  %297 = vmatmul.f32.gmra.mxu0 %v231
  %v298 = vpop.f32.mrf.mxu0
  %v299 = vadd.f32 0.0, %v298
  %300 = vmatmul.f32.gmra.mxu0 %v234
  %v301 = vpop.f32.mrf.mxu0
  %v302 = vadd.f32 0.0, %v301
  %303 = vmatmul.f32.gmra.mxu0 %v237
  %v304 = vpop.f32.mrf.mxu0
  %v305 = vadd.f32 0.0, %v304
  %306 = vmatmul.f32.gmra.mxu0 %v240
  %v307 = vpop.f32.mrf.mxu0
  %v308 = vadd.f32 0.0, %v307
  %309 = vmatmul.f32.gmra.mxu0 %v243
  %v310 = vpop.f32.mrf.mxu0
  %v311 = vadd.f32 0.0, %v310
  %312 = vmatmul.f32.gmra.mxu0 %v246
  %v313 = vpop.f32.mrf.mxu0
  %v314 = vadd.f32 0.0, %v313
  %315 = vmatmul.f32.gmra.mxu0 %v249
  %v316 = vpop.f32.mrf.mxu0
  %v317 = vadd.f32 0.0, %v316
  %318 = vdwg.mxu0
  %v319 = vadd.f32 %v140, %v272
  %v320 = vadd.f32 %v143, %v275
  %v321 = vadd.f32 %v146, %v278
  %v322 = vadd.f32 %v149, %v281
  %v323 = vadd.f32 %v152, %v284
  %v324 = vadd.f32 %v155, %v287
  %v325 = vadd.f32 %v158, %v290
  %v326 = vadd.f32 %v161, %v293
  %v327 = vadd.f32 %v164, %v296
  %v328 = vadd.f32 %v167, %v299
  %v329 = vadd.f32 %v170, %v302
  %v330 = vadd.f32 %v173, %v305
  %v331 = vadd.f32 %v176, %v308
  %v332 = vadd.f32 %v179, %v311
  %v333 = vadd.f32 %v182, %v314
  %v334 = vadd.f32 %v185, %v317
  %v335 = vadd.f32 %v272, %v319
  %v336 = vadd.f32 %v275, %v320
  %v337 = vadd.f32 %v278, %v321
  %v338 = vadd.f32 %v281, %v322
  %v339 = vadd.f32 %v284, %v323
  %v340 = vadd.f32 %v287, %v324
  %v341 = vadd.f32 %v290, %v325
  %v342 = vadd.f32 %v293, %v326
  %v343 = vadd.f32 %v296, %v327
  %v344 = vadd.f32 %v299, %v328
  %v345 = vadd.f32 %v302, %v329
  %v346 = vadd.f32 %v305, %v330
  %v347 = vadd.f32 %v308, %v331
  %v348 = vadd.f32 %v311, %v332
  %v349 = vadd.f32 %v314, %v333
  %v350 = vadd.f32 %v317, %v334
  %v351 = vadd.f32 %v140, %v319
  %v352 = vadd.f32 %v143, %v320
  %v353 = vadd.f32 %v146, %v321
  %v354 = vadd.f32 %v149, %v322
  %v355 = vadd.f32 %v152, %v323
  %v356 = vadd.f32 %v155, %v324
  %v357 = vadd.f32 %v158, %v325
  %v358 = vadd.f32 %v161, %v326
  %v359 = vadd.f32 %v164, %v327
  %v360 = vadd.f32 %v167, %v328
  %v361 = vadd.f32 %v170, %v329
  %v362 = vadd.f32 %v173, %v330
  %v363 = vadd.f32 %v176, %v331
  %v364 = vadd.f32 %v179, %v332
  %v365 = vadd.f32 %v182, %v333
  %v366 = vadd.f32 %v185, %v334
  %v367 = vadd.f32 %v319, %v335
  %v368 = vadd.f32 %v320, %v336
  %v369 = vadd.f32 %v321, %v337
  %v370 = vadd.f32 %v322, %v338
  %v371 = vadd.f32 %v323, %v339
  %v372 = vadd.f32 %v324, %v340
  %v373 = vadd.f32 %v325, %v341
  %v374 = vadd.f32 %v326, %v342
  %v375 = vadd.f32 %v327, %v343
  %v376 = vadd.f32 %v328, %v344
  %v377 = vadd.f32 %v329, %v345
  %v378 = vadd.f32 %v330, %v346
  %v379 = vadd.f32 %v331, %v347
  %v380 = vadd.f32 %v332, %v348
  %v381 = vadd.f32 %v333, %v349
  %v382 = vadd.f32 %v334, %v350
  %vm383 = vcmask 31744
  %384 = vst.msk [vmem:[%s4] sm:$0xff] %vm383, %v319
  %385 = vst.msk [vmem:[%s4 + $0x8] sm:$0xff] %vm383, %v320
  %386 = vst.msk [vmem:[%s4 + $0x10] sm:$0xff] %vm383, %v321
  %387 = vst.msk [vmem:[%s4 + $0x18] sm:$0xff] %vm383, %v322
  %388 = vst.msk [vmem:[%s4 + $0x20] sm:$0xff] %vm383, %v323
  %389 = vst.msk [vmem:[%s4 + $0x28] sm:$0xff] %vm383, %v324
  %390 = vst.msk [vmem:[%s4 + $0x30] sm:$0xff] %vm383, %v325
  %391 = vst.msk [vmem:[%s4 + $0x38] sm:$0xff] %vm383, %v326
  %392 = vst.msk [vmem:[%s4 + $0x40] sm:$0xff] %vm383, %v327
  %393 = vst.msk [vmem:[%s4 + $0x48] sm:$0xff] %vm383, %v328
  %394 = vst.msk [vmem:[%s4 + $0x50] sm:$0xff] %vm383, %v329
  %395 = vst.msk [vmem:[%s4 + $0x58] sm:$0xff] %vm383, %v330
  %396 = vst.msk [vmem:[%s4 + $0x60] sm:$0xff] %vm383, %v331
  %397 = vst.msk [vmem:[%s4 + $0x68] sm:$0xff] %vm383, %v332
  %398 = vst.msk [vmem:[%s4 + $0x70] sm:$0xff] %vm383, %v333
  %399 = vst.msk [vmem:[%s4 + $0x78] sm:$0xff] %vm383, %v334
  %s400 = scalar_lea.vmem %s4, 128
  %401 = vst.msk [vmem:[%s400] sm:$0xff] %vm383, %v335
  %402 = vst.msk [vmem:[%s400 + $0x8] sm:$0xff] %vm383, %v336
  %403 = vst.msk [vmem:[%s400 + $0x10] sm:$0xff] %vm383, %v337
  %404 = vst.msk [vmem:[%s400 + $0x18] sm:$0xff] %vm383, %v338
  %405 = vst.msk [vmem:[%s400 + $0x20] sm:$0xff] %vm383, %v339
  %406 = vst.msk [vmem:[%s400 + $0x28] sm:$0xff] %vm383, %v340
  %407 = vst.msk [vmem:[%s400 + $0x30] sm:$0xff] %vm383, %v341
  %408 = vst.msk [vmem:[%s400 + $0x38] sm:$0xff] %vm383, %v342
  %409 = vst.msk [vmem:[%s400 + $0x40] sm:$0xff] %vm383, %v343
  %410 = vst.msk [vmem:[%s400 + $0x48] sm:$0xff] %vm383, %v344
  %411 = vst.msk [vmem:[%s400 + $0x50] sm:$0xff] %vm383, %v345
  %412 = vst.msk [vmem:[%s400 + $0x58] sm:$0xff] %vm383, %v346
  %413 = vst.msk [vmem:[%s400 + $0x60] sm:$0xff] %vm383, %v347
  %414 = vst.msk [vmem:[%s400 + $0x68] sm:$0xff] %vm383, %v348
  %415 = vst.msk [vmem:[%s400 + $0x70] sm:$0xff] %vm383, %v349
  %416 = vst.msk [vmem:[%s400 + $0x78] sm:$0xff] %vm383, %v350
  %s417 = scalar_lea.vmem %s4, 256
  %418 = vst.msk [vmem:[%s417] sm:$0xff] %vm383, %v351
  %419 = vst.msk [vmem:[%s417 + $0x8] sm:$0xff] %vm383, %v352
  %420 = vst.msk [vmem:[%s417 + $0x10] sm:$0xff] %vm383, %v353
  %421 = vst.msk [vmem:[%s417 + $0x18] sm:$0xff] %vm383, %v354
  %422 = vst.msk [vmem:[%s417 + $0x20] sm:$0xff] %vm383, %v355
  %423 = vst.msk [vmem:[%s417 + $0x28] sm:$0xff] %vm383, %v356
  %424 = vst.msk [vmem:[%s417 + $0x30] sm:$0xff] %vm383, %v357
  %425 = vst.msk [vmem:[%s417 + $0x38] sm:$0xff] %vm383, %v358
  %426 = vst.msk [vmem:[%s417 + $0x40] sm:$0xff] %vm383, %v359
  %427 = vst.msk [vmem:[%s417 + $0x48] sm:$0xff] %vm383, %v360
  %428 = vst.msk [vmem:[%s417 + $0x50] sm:$0xff] %vm383, %v361
  %429 = vst.msk [vmem:[%s417 + $0x58] sm:$0xff] %vm383, %v362
  %430 = vst.msk [vmem:[%s417 + $0x60] sm:$0xff] %vm383, %v363
  %431 = vst.msk [vmem:[%s417 + $0x68] sm:$0xff] %vm383, %v364
  %432 = vst.msk [vmem:[%s417 + $0x70] sm:$0xff] %vm383, %v365
  %433 = vst.msk [vmem:[%s417 + $0x78] sm:$0xff] %vm383, %v366
  %s434 = scalar_lea.vmem %s4, 384
  %435 = vst.msk [vmem:[%s434] sm:$0xff] %vm383, %v367
  %436 = vst.msk [vmem:[%s434 + $0x8] sm:$0xff] %vm383, %v368
  %437 = vst.msk [vmem:[%s434 + $0x10] sm:$0xff] %vm383, %v369
  %438 = vst.msk [vmem:[%s434 + $0x18] sm:$0xff] %vm383, %v370
  %439 = vst.msk [vmem:[%s434 + $0x20] sm:$0xff] %vm383, %v371
  %440 = vst.msk [vmem:[%s434 + $0x28] sm:$0xff] %vm383, %v372
  %441 = vst.msk [vmem:[%s434 + $0x30] sm:$0xff] %vm383, %v373
  %442 = vst.msk [vmem:[%s434 + $0x38] sm:$0xff] %vm383, %v374
  %443 = vst.msk [vmem:[%s434 + $0x40] sm:$0xff] %vm383, %v375
  %444 = vst.msk [vmem:[%s434 + $0x48] sm:$0xff] %vm383, %v376
  %445 = vst.msk [vmem:[%s434 + $0x50] sm:$0xff] %vm383, %v377
  %446 = vst.msk [vmem:[%s434 + $0x58] sm:$0xff] %vm383, %v378
  %447 = vst.msk [vmem:[%s434 + $0x60] sm:$0xff] %vm383, %v379
  %448 = vst.msk [vmem:[%s434 + $0x68] sm:$0xff] %vm383, %v380
  %449 = vst.msk [vmem:[%s434 + $0x70] sm:$0xff] %vm383, %v381
  %450 = vst.msk [vmem:[%s434 + $0x78] sm:$0xff] %vm383, %v382
  // Predicated region
  $region18: #{darts_forward.6} parent=0 // pred_check
    _
  $region19: #{darts_forward.6} parent=0 // pred_check_branch
    %452 = sbr.rel (0) target = $region21
  $region20: #{darts_forward.6} parent=0 // pred_region
    _
  $region21: #{darts_forward.6} parent=0 // pred_fallthru
    _
  // Predicated region
  $region22: #{darts_forward.6} parent=0 // pred_check
    _
  $region23: #{darts_forward.6} parent=0 // pred_check_branch
    %454 = sbr.rel (0) target = $region25
  $region24: #{darts_forward.6} parent=0 // pred_region
    _
  $region25: #{darts_forward.6} parent=0 // pred_fallthru
    _

// kernel: darts_forward.8
$region0: #{darts_forward.8}
  #allocation0 [shape = 'u32[]', space=smem, size = 0x4, offset = 0x4, fixed_abs, tag = 'smem constant byte address 0x4 - core index']
  #allocation1 [shape = 'u32[72,128]{1,0:T(1,128)}', space=vmem, size = 0x9000, scoped, tag = 'internal scratch']
  %s0 = inlined_call_operand.vmem [shape: f32[32,16], index: 0, kind: input, shape index: {}]
  %s1 = inlined_call_operand.vmem [shape: f32[32,16], index: 1, kind: input, shape index: {}]
  %s2 = inlined_call_operand.vmem [shape: f32[32,32], index: 2, kind: input, shape index: {}]
  %s3 = inlined_call_operand.vmem [shape: f32[16,8], index: 3, kind: input, shape index: {}]
  %s4 = inlined_call_operand.vmem [shape: f32[16,8], index: 4, kind: input, shape index: {}]
  %s5 = inlined_call_operand.vmem [shape: f32[32,8], index: 5, kind: input, shape index: {}]
  %s6 = inlined_call_operand.vmem [shape: f32[4,32,8], index: 6, kind: output, shape index: {}]
  %s7 = sld [smem:[#allocation0]]
  $region34: #{darts_forward.8} parent=0
    _
  %s9 = ssub.s32 1, %s7
  %s10 = scalar_select 0, %s9, %s7
  // Predicated region
  $region2: #{darts_forward.8} parent=0 // pred_check
    _
  $region3: #{darts_forward.8} parent=0 // pred_check_branch
    %12 = sbr.rel (0) target = $region5
  $region4: #{darts_forward.8} parent=0 // pred_region
    _
  $region5: #{darts_forward.8} parent=0 // pred_fallthru
    _
  // Predicated region
  $region6: #{darts_forward.8} parent=0 // pred_check
    _
  $region7: #{darts_forward.8} parent=0 // pred_check_branch
    %14 = sbr.rel (0) target = $region9
  $region8: #{darts_forward.8} parent=0 // pred_region
    _
  $region9: #{darts_forward.8} parent=0 // pred_fallthru
    _
  // Predicated region
  $region10: #{darts_forward.8} parent=0 // pred_check
    _
  $region11: #{darts_forward.8} parent=0 // pred_check_branch
    %16 = sbr.rel (0) target = $region13
  $region12: #{darts_forward.8} parent=0 // pred_region
    _
  $region13: #{darts_forward.8} parent=0 // pred_fallthru
    _
  // Predicated region
  $region14: #{darts_forward.8} parent=0 // pred_check
    _
  $region15: #{darts_forward.8} parent=0 // pred_check_branch
    %18 = sbr.rel (0) target = $region17
  $region16: #{darts_forward.8} parent=0 // pred_region
    _
  $region17: #{darts_forward.8} parent=0 // pred_fallthru
    _
  // Predicated region
  $region18: #{darts_forward.8} parent=0 // pred_check
    _
  $region19: #{darts_forward.8} parent=0 // pred_check_branch
    %20 = sbr.rel (0) target = $region21
  $region20: #{darts_forward.8} parent=0 // pred_region
    _
  $region21: #{darts_forward.8} parent=0 // pred_fallthru
    _
  // Predicated region
  $region22: #{darts_forward.8} parent=0 // pred_check
    _
  $region23: #{darts_forward.8} parent=0 // pred_check_branch
    %22 = sbr.rel (0) target = $region25
  $region24: #{darts_forward.8} parent=0 // pred_region
    _
  $region25: #{darts_forward.8} parent=0 // pred_fallthru
    _
  %v23 = vld [vmem:[%s0] sm:$0xff]
  %v24 = vld [vmem:[%s0 + $0x8] sm:$0xff]
  %v25 = vld [vmem:[%s0 + $0x10] sm:$0xff]
  %v26 = vld [vmem:[%s0 + $0x18] sm:$0xff]
  %v27 = vld [vmem:[%s1] sm:$0xff]
  %v28 = vld [vmem:[%s1 + $0x8] sm:$0xff]
  %v29 = vld [vmem:[%s1 + $0x10] sm:$0xff]
  %v30 = vld [vmem:[%s1 + $0x18] sm:$0xff]
  %v31 = vld [vmem:[%s2] sm:$0xff]
  %v32 = vld [vmem:[%s2 + $0x8] sm:$0xff]
  %v33 = vld [vmem:[%s2 + $0x10] sm:$0xff]
  %v34 = vld [vmem:[%s2 + $0x18] sm:$0xff]
  %v35 = vld [vmem:[%s3] sm:$0xff]
  %v36 = vld [vmem:[%s3 + $0x8] sm:$0xff]
  %v37 = vld [vmem:[%s4] sm:$0xff]
  %v38 = vld [vmem:[%s4 + $0x8] sm:$0xff]
  %v39 = vld [vmem:[%s5] sm:$0xff]
  %v40 = vld [vmem:[%s5 + $0x8] sm:$0xff]
  %v41 = vld [vmem:[%s5 + $0x10] sm:$0xff]
  %v42 = vld [vmem:[%s5 + $0x18] sm:$0xff]
  %v43 = vmax.f32 %v23, 0.0
  %v44 = vmax.f32 %v24, 0.0
  %v45 = vmax.f32 %v25, 0.0
  %v46 = vmax.f32 %v26, 0.0
  %v47 = vmax.f32 %v27, 0.0
  %v48 = vmax.f32 %v28, 0.0
  %v49 = vmax.f32 %v29, 0.0
  %v50 = vmax.f32 %v30, 0.0
  %vm51 = vcmask 130048
  %v53 = vsel %vm51, %v47, 0
  %v56 = vsel %vm51, %v48, 0
  %v59 = vsel %vm51, %v49, 0
  %v62 = vsel %vm51, %v50, 0
  %64 = vmatpush.msra.mxu0 0.0
  %65 = vmatpush.msra.mxu0 0.0
  %66 = vmatpush.msra.mxu0 0.0
  %67 = vmatpush.msra.mxu0 0.0
  %68 = vmatpush.msra.mxu0 0.0
  %69 = vmatpush.msra.mxu0 0.0
  %70 = vmatpush.msra.mxu0 0.0
  %71 = vmatpush.msra.mxu0 0.0
  %72 = vmatpush.msra.mxu0 0.0
  %73 = vmatpush.msra.mxu0 0.0
  %74 = vmatpush.msra.mxu0 0.0
  %75 = vmatpush.msra.mxu0 0.0
  %76 = vmatpush.msra.mxu0 0.0
  %77 = vmatpush.msra.mxu0 0.0
  %78 = vmatpush.msra.mxu0 %v38
  %79 = vmatpush.msra.mxu0 %v37
  %80 = vmatmul.f32.gmra.mxu0 %v53
  %v81 = vpop.f32.mrf.mxu0
  %v82 = vadd.f32 0.0, %v81
  %83 = vmatmul.f32.gmra.mxu0 %v56
  %v84 = vpop.f32.mrf.mxu0
  %v85 = vadd.f32 0.0, %v84
  %86 = vmatmul.f32.gmra.mxu0 %v59
  %v87 = vpop.f32.mrf.mxu0
  %v88 = vadd.f32 0.0, %v87
  %89 = vmatmul.f32.gmra.mxu0 %v62
  %v90 = vpop.f32.mrf.mxu0
  %v91 = vadd.f32 0.0, %v90
  %92 = vdwg.mxu0
  %v94 = vsel %vm51, %v43, 0
  %v97 = vsel %vm51, %v44, 0
  %v100 = vsel %vm51, %v45, 0
  %v103 = vsel %vm51, %v46, 0
  %105 = vmatpush.msra.mxu0 0.0
  %106 = vmatpush.msra.mxu0 0.0
  %107 = vmatpush.msra.mxu0 0.0
  %108 = vmatpush.msra.mxu0 0.0
  %109 = vmatpush.msra.mxu0 0.0
  %110 = vmatpush.msra.mxu0 0.0
  %111 = vmatpush.msra.mxu0 0.0
  %112 = vmatpush.msra.mxu0 0.0
  %113 = vmatpush.msra.mxu0 0.0
  %114 = vmatpush.msra.mxu0 0.0
  %115 = vmatpush.msra.mxu0 0.0
  %116 = vmatpush.msra.mxu0 0.0
  %117 = vmatpush.msra.mxu0 0.0
  %118 = vmatpush.msra.mxu0 0.0
  %119 = vmatpush.msra.mxu0 %v36
  %120 = vmatpush.msra.mxu0 %v35
  %121 = vmatmul.f32.gmra.mxu0 %v94
  %v122 = vpop.f32.mrf.mxu0
  %v123 = vadd.f32 %v82, %v122
  %124 = vmatmul.f32.gmra.mxu0 %v97
  %v125 = vpop.f32.mrf.mxu0
  %v126 = vadd.f32 %v85, %v125
  %127 = vmatmul.f32.gmra.mxu0 %v100
  %v128 = vpop.f32.mrf.mxu0
  %v129 = vadd.f32 %v88, %v128
  %130 = vmatmul.f32.gmra.mxu0 %v103
  %v131 = vpop.f32.mrf.mxu0
  %v132 = vadd.f32 %v91, %v131
  %133 = vdwg.mxu0
  %v134 = vmax.f32 %v31, 0.0
  %v135 = vmax.f32 %v32, 0.0
  %v136 = vmax.f32 %v33, 0.0
  %v137 = vmax.f32 %v34, 0.0
  %vm138 = vcmask 261120
  %v140 = vsel %vm138, %v134, 0
  %v143 = vsel %vm138, %v135, 0
  %v146 = vsel %vm138, %v136, 0
  %v149 = vsel %vm138, %v137, 0
  %151 = vmatpush.msra.mxu0 0.0
  %152 = vmatpush.msra.mxu0 0.0
  %153 = vmatpush.msra.mxu0 0.0
  %154 = vmatpush.msra.mxu0 0.0
  %155 = vmatpush.msra.mxu0 0.0
  %156 = vmatpush.msra.mxu0 0.0
  %157 = vmatpush.msra.mxu0 0.0
  %158 = vmatpush.msra.mxu0 0.0
  %159 = vmatpush.msra.mxu0 0.0
  %160 = vmatpush.msra.mxu0 0.0
  %161 = vmatpush.msra.mxu0 0.0
  %162 = vmatpush.msra.mxu0 0.0
  %163 = vmatpush.msra.mxu0 %v42
  %164 = vmatpush.msra.mxu0 %v41
  %165 = vmatpush.msra.mxu0 %v40
  %166 = vmatpush.msra.mxu0 %v39
  %167 = vmatmul.f32.gmra.mxu0 %v140
  %v168 = vpop.f32.mrf.mxu0
  %v169 = vadd.f32 0.0, %v168
  %170 = vmatmul.f32.gmra.mxu0 %v143
  %v171 = vpop.f32.mrf.mxu0
  %v172 = vadd.f32 0.0, %v171
  %173 = vmatmul.f32.gmra.mxu0 %v146
  %v174 = vpop.f32.mrf.mxu0
  %v175 = vadd.f32 0.0, %v174
  %176 = vmatmul.f32.gmra.mxu0 %v149
  %v177 = vpop.f32.mrf.mxu0
  %v178 = vadd.f32 0.0, %v177
  %179 = vdwg.mxu0
  %v180 = vadd.f32 %v123, %v169
  %v181 = vadd.f32 %v126, %v172
  %v182 = vadd.f32 %v129, %v175
  %v183 = vadd.f32 %v132, %v178
  %v184 = vadd.f32 %v169, %v180
  %v185 = vadd.f32 %v172, %v181
  %v186 = vadd.f32 %v175, %v182
  %v187 = vadd.f32 %v178, %v183
  %v188 = vadd.f32 %v123, %v180
  %v189 = vadd.f32 %v126, %v181
  %v190 = vadd.f32 %v129, %v182
  %v191 = vadd.f32 %v132, %v183
  %v192 = vadd.f32 %v180, %v184
  %v193 = vadd.f32 %v181, %v185
  %v194 = vadd.f32 %v182, %v186
  %v195 = vadd.f32 %v183, %v187
  %vm196 = vcmask 64512
  %197 = vst.msk [vmem:[%s6] sm:$0xff] %vm196, %v180
  %198 = vst.msk [vmem:[%s6 + $0x8] sm:$0xff] %vm196, %v181
  %199 = vst.msk [vmem:[%s6 + $0x10] sm:$0xff] %vm196, %v182
  %200 = vst.msk [vmem:[%s6 + $0x18] sm:$0xff] %vm196, %v183
  %s201 = scalar_lea.vmem %s6, 32
  %202 = vst.msk [vmem:[%s201] sm:$0xff] %vm196, %v184
  %203 = vst.msk [vmem:[%s201 + $0x8] sm:$0xff] %vm196, %v185
  %204 = vst.msk [vmem:[%s201 + $0x10] sm:$0xff] %vm196, %v186
  %205 = vst.msk [vmem:[%s201 + $0x18] sm:$0xff] %vm196, %v187
  %s206 = scalar_lea.vmem %s6, 64
  %207 = vst.msk [vmem:[%s206] sm:$0xff] %vm196, %v188
  %208 = vst.msk [vmem:[%s206 + $0x8] sm:$0xff] %vm196, %v189
  %209 = vst.msk [vmem:[%s206 + $0x10] sm:$0xff] %vm196, %v190
  %210 = vst.msk [vmem:[%s206 + $0x18] sm:$0xff] %vm196, %v191
  %s211 = scalar_lea.vmem %s6, 96
  %212 = vst.msk [vmem:[%s211] sm:$0xff] %vm196, %v192
  %213 = vst.msk [vmem:[%s211 + $0x8] sm:$0xff] %vm196, %v193
  %214 = vst.msk [vmem:[%s211 + $0x10] sm:$0xff] %vm196, %v194
  %215 = vst.msk [vmem:[%s211 + $0x18] sm:$0xff] %vm196, %v195
  // Predicated region
  $region26: #{darts_forward.8} parent=0 // pred_check
    _
  $region27: #{darts_forward.8} parent=0 // pred_check_branch
    %217 = sbr.rel (0) target = $region29
  $region28: #{darts_forward.8} parent=0 // pred_region
    _
  $region29: #{darts_forward.8} parent=0 // pred_fallthru
    _
  // Predicated region
  $region30: #{darts_forward.8} parent=0 // pred_check
    _
  $region31: #{darts_forward.8} parent=0 // pred_check_branch
    %219 = sbr.rel (0) target = $region33
  $region32: #{darts_forward.8} parent=0 // pred_region
    _
  $region33: #{darts_forward.8} parent=0 // pred_fallthru
    _

// kernel: darts_forward.7
$region0: #{darts_forward.7}
  #allocation0 [shape = 'u32[]', space=smem, size = 0x4, offset = 0x4, fixed_abs, tag = 'smem constant byte address 0x4 - core index']
  #allocation1 [shape = 'u32[72,128]{1,0:T(1,128)}', space=vmem, size = 0x9000, scoped, tag = 'internal scratch']
  %s0 = inlined_call_operand.vmem [shape: f32[32,12], index: 0, kind: input, shape index: {}]
  %s1 = inlined_call_operand.vmem [shape: f32[32,12], index: 1, kind: input, shape index: {}]
  %s2 = inlined_call_operand.vmem [shape: f32[32,16], index: 2, kind: input, shape index: {}]
  %s3 = inlined_call_operand.vmem [shape: f32[32,16], index: 3, kind: input, shape index: {}]
  %s4 = inlined_call_operand.vmem [shape: f32[12,8], index: 4, kind: input, shape index: {}]
  %s5 = inlined_call_operand.vmem [shape: f32[16,8], index: 5, kind: input, shape index: {}]
  %s6 = inlined_call_operand.vmem [shape: f32[8,8], index: 6, kind: input, shape index: {}]
  %s7 = inlined_call_operand.vmem [shape: f32[8,8], index: 7, kind: input, shape index: {}]
  %s8 = inlined_call_operand.vmem [shape: f32[8,8], index: 8, kind: input, shape index: {}]
  %s9 = inlined_call_operand.vmem [shape: f32[8,8], index: 9, kind: input, shape index: {}]
  %s10 = inlined_call_operand.vmem [shape: f32[8,8], index: 10, kind: input, shape index: {}]
  %s11 = inlined_call_operand.vmem [shape: f32[8,8], index: 11, kind: input, shape index: {}]
  %s12 = inlined_call_operand.vmem [shape: f32[8,8], index: 12, kind: input, shape index: {}]
  %s13 = inlined_call_operand.vmem [shape: f32[8,8], index: 13, kind: input, shape index: {}]
  %s14 = inlined_call_operand.vmem [shape: f32[4,32,8], index: 14, kind: output, shape index: {}]
  %s15 = sld [smem:[#allocation0]]
  $region66: #{darts_forward.7} parent=0
    _
  %s17 = ssub.s32 1, %s15
  %s18 = scalar_select 0, %s17, %s15
  // Predicated region
  $region2: #{darts_forward.7} parent=0 // pred_check
    _
  $region3: #{darts_forward.7} parent=0 // pred_check_branch
    %20 = sbr.rel (0) target = $region5
  $region4: #{darts_forward.7} parent=0 // pred_region
    _
  $region5: #{darts_forward.7} parent=0 // pred_fallthru
    _
  // Predicated region
  $region6: #{darts_forward.7} parent=0 // pred_check
    _
  $region7: #{darts_forward.7} parent=0 // pred_check_branch
    %22 = sbr.rel (0) target = $region9
  $region8: #{darts_forward.7} parent=0 // pred_region
    _
  $region9: #{darts_forward.7} parent=0 // pred_fallthru
    _
  // Predicated region
  $region10: #{darts_forward.7} parent=0 // pred_check
    _
  $region11: #{darts_forward.7} parent=0 // pred_check_branch
    %24 = sbr.rel (0) target = $region13
  $region12: #{darts_forward.7} parent=0 // pred_region
    _
  $region13: #{darts_forward.7} parent=0 // pred_fallthru
    _
  // Predicated region
  $region14: #{darts_forward.7} parent=0 // pred_check
    _
  $region15: #{darts_forward.7} parent=0 // pred_check_branch
    %26 = sbr.rel (0) target = $region17
  $region16: #{darts_forward.7} parent=0 // pred_region
    _
  $region17: #{darts_forward.7} parent=0 // pred_fallthru
    _
  // Predicated region
  $region18: #{darts_forward.7} parent=0 // pred_check
    _
  $region19: #{darts_forward.7} parent=0 // pred_check_branch
    %28 = sbr.rel (0) target = $region21
  $region20: #{darts_forward.7} parent=0 // pred_region
    _
  $region21: #{darts_forward.7} parent=0 // pred_fallthru
    _
  // Predicated region
  $region22: #{darts_forward.7} parent=0 // pred_check
    _
  $region23: #{darts_forward.7} parent=0 // pred_check_branch
    %30 = sbr.rel (0) target = $region25
  $region24: #{darts_forward.7} parent=0 // pred_region
    _
  $region25: #{darts_forward.7} parent=0 // pred_fallthru
    _
  // Predicated region
  $region26: #{darts_forward.7} parent=0 // pred_check
    _
  $region27: #{darts_forward.7} parent=0 // pred_check_branch
    %32 = sbr.rel (0) target = $region29
  $region28: #{darts_forward.7} parent=0 // pred_region
    _
  $region29: #{darts_forward.7} parent=0 // pred_fallthru
    _
  // Predicated region
  $region30: #{darts_forward.7} parent=0 // pred_check
    _
  $region31: #{darts_forward.7} parent=0 // pred_check_branch
    %34 = sbr.rel (0) target = $region33
  $region32: #{darts_forward.7} parent=0 // pred_region
    _
  $region33: #{darts_forward.7} parent=0 // pred_fallthru
    _
  // Predicated region
  $region34: #{darts_forward.7} parent=0 // pred_check
    _
  $region35: #{darts_forward.7} parent=0 // pred_check_branch
    %36 = sbr.rel (0) target = $region37
  $region36: #{darts_forward.7} parent=0 // pred_region
    _
  $region37: #{darts_forward.7} parent=0 // pred_fallthru
    _
  // Predicated region
  $region38: #{darts_forward.7} parent=0 // pred_check
    _
  $region39: #{darts_forward.7} parent=0 // pred_check_branch
    %38 = sbr.rel (0) target = $region41
  $region40: #{darts_forward.7} parent=0 // pred_region
    _
  $region41: #{darts_forward.7} parent=0 // pred_fallthru
    _
  // Predicated region
  $region42: #{darts_forward.7} parent=0 // pred_check
    _
  $region43: #{darts_forward.7} parent=0 // pred_check_branch
    %40 = sbr.rel (0) target = $region45
  $region44: #{darts_forward.7} parent=0 // pred_region
    _
  $region45: #{darts_forward.7} parent=0 // pred_fallthru
    _
  // Predicated region
  $region46: #{darts_forward.7} parent=0 // pred_check
    _
  $region47: #{darts_forward.7} parent=0 // pred_check_branch
    %42 = sbr.rel (0) target = $region49
  $region48: #{darts_forward.7} parent=0 // pred_region
    _
  $region49: #{darts_forward.7} parent=0 // pred_fallthru
    _
  // Predicated region
  $region50: #{darts_forward.7} parent=0 // pred_check
    _
  $region51: #{darts_forward.7} parent=0 // pred_check_branch
    %44 = sbr.rel (0) target = $region53
  $region52: #{darts_forward.7} parent=0 // pred_region
    _
  $region53: #{darts_forward.7} parent=0 // pred_fallthru
    _
  // Predicated region
  $region54: #{darts_forward.7} parent=0 // pred_check
    _
  $region55: #{darts_forward.7} parent=0 // pred_check_branch
    %46 = sbr.rel (0) target = $region57
  $region56: #{darts_forward.7} parent=0 // pred_region
    _
  $region57: #{darts_forward.7} parent=0 // pred_fallthru
    _
  %v47 = vld [vmem:[%s0] sm:$0xff]
  %v48 = vld [vmem:[%s0 + $0x8] sm:$0xff]
  %v49 = vld [vmem:[%s0 + $0x10] sm:$0xff]
  %v50 = vld [vmem:[%s0 + $0x18] sm:$0xff]
  %v51 = vld [vmem:[%s1] sm:$0xff]
  %v52 = vld [vmem:[%s1 + $0x8] sm:$0xff]
  %v53 = vld [vmem:[%s1 + $0x10] sm:$0xff]
  %v54 = vld [vmem:[%s1 + $0x18] sm:$0xff]
  %v55 = vld [vmem:[%s2] sm:$0xff]
  %v56 = vld [vmem:[%s2 + $0x8] sm:$0xff]
  %v57 = vld [vmem:[%s2 + $0x10] sm:$0xff]
  %v58 = vld [vmem:[%s2 + $0x18] sm:$0xff]
  %v59 = vld [vmem:[%s3] sm:$0xff]
  %v60 = vld [vmem:[%s3 + $0x8] sm:$0xff]
  %v61 = vld [vmem:[%s3 + $0x10] sm:$0xff]
  %v62 = vld [vmem:[%s3 + $0x18] sm:$0xff]
  %v63 = vld [vmem:[%s4] sm:$0xff]
  %v64 = vld [vmem:[%s4 + $0x8] sm:$0xf]
  %v65 = vld [vmem:[%s5] sm:$0xff]
  %v66 = vld [vmem:[%s5 + $0x8] sm:$0xff]
  %v67 = vld [vmem:[%s6] sm:$0xff]
  %v68 = vld [vmem:[%s7] sm:$0xff]
  %v69 = vld [vmem:[%s8] sm:$0xff]
  %v70 = vld [vmem:[%s9] sm:$0xff]
  %v71 = vld [vmem:[%s10] sm:$0xff]
  %v72 = vld [vmem:[%s11] sm:$0xff]
  %v73 = vld [vmem:[%s12] sm:$0xff]
  %v74 = vld [vmem:[%s13] sm:$0xff]
  %v75 = vmax.f32 %v47, 0.0
  %v76 = vmax.f32 %v48, 0.0
  %v77 = vmax.f32 %v49, 0.0
  %v78 = vmax.f32 %v50, 0.0
  %vm79 = vcmask 97280
  %v81 = vsel %vm79, %v75, 0
  %v84 = vsel %vm79, %v76, 0
  %v87 = vsel %vm79, %v77, 0
  %v90 = vsel %vm79, %v78, 0
  %vm92 = vcmask 1043456
  %v94 = vsel %vm92, %v64, 0
  %96 = vmatpush.msra.mxu0 0.0
  %97 = vmatpush.msra.mxu0 0.0
  %98 = vmatpush.msra.mxu0 0.0
  %99 = vmatpush.msra.mxu0 0.0
  %100 = vmatpush.msra.mxu0 0.0
  %101 = vmatpush.msra.mxu0 0.0
  %102 = vmatpush.msra.mxu0 0.0
  %103 = vmatpush.msra.mxu0 0.0
  %104 = vmatpush.msra.mxu0 0.0
  %105 = vmatpush.msra.mxu0 0.0
  %106 = vmatpush.msra.mxu0 0.0
  %107 = vmatpush.msra.mxu0 0.0
  %108 = vmatpush.msra.mxu0 0.0
  %109 = vmatpush.msra.mxu0 0.0
  %110 = vmatpush.msra.mxu0 %v94
  %111 = vmatpush.msra.mxu0 %v63
  %112 = vmatmul.f32.gmra.mxu0 %v81
  %v113 = vpop.f32.mrf.mxu0
  %v114 = vadd.f32 0.0, %v113
  %115 = vmatmul.f32.gmra.mxu0 %v84
  %v116 = vpop.f32.mrf.mxu0
  %v117 = vadd.f32 0.0, %v116
  %118 = vmatmul.f32.gmra.mxu0 %v87
  %v119 = vpop.f32.mrf.mxu0
  %v120 = vadd.f32 0.0, %v119
  %121 = vmatmul.f32.gmra.mxu0 %v90
  %v122 = vpop.f32.mrf.mxu0
  %v123 = vadd.f32 0.0, %v122
  %124 = vdwg.mxu0
  %v125 = vmax.f32 %v51, 0.0
  %v126 = vmax.f32 %v52, 0.0
  %v127 = vmax.f32 %v53, 0.0
  %v128 = vmax.f32 %v54, 0.0
  %v130 = vsel %vm79, %v125, 0
  %v133 = vsel %vm79, %v126, 0
  %v136 = vsel %vm79, %v127, 0
  %v139 = vsel %vm79, %v128, 0
  %141 = vmatpush.msra.mxu0 0.0
  %142 = vmatpush.msra.mxu0 0.0
  %143 = vmatpush.msra.mxu0 0.0
  %144 = vmatpush.msra.mxu0 0.0
  %145 = vmatpush.msra.mxu0 0.0
  %146 = vmatpush.msra.mxu0 0.0
  %147 = vmatpush.msra.mxu0 0.0
  %148 = vmatpush.msra.mxu0 0.0
  %149 = vmatpush.msra.mxu0 0.0
  %150 = vmatpush.msra.mxu0 0.0
  %151 = vmatpush.msra.mxu0 0.0
  %152 = vmatpush.msra.mxu0 0.0
  %153 = vmatpush.msra.mxu0 0.0
  %154 = vmatpush.msra.mxu0 0.0
  %155 = vmatpush.msra.mxu0 %v94
  %156 = vmatpush.msra.mxu0 %v63
  %157 = vmatmul.f32.gmra.mxu0 %v130
  %v158 = vpop.f32.mrf.mxu0
  %v159 = vadd.f32 0.0, %v158
  %160 = vmatmul.f32.gmra.mxu0 %v133
  %v161 = vpop.f32.mrf.mxu0
  %v162 = vadd.f32 0.0, %v161
  %163 = vmatmul.f32.gmra.mxu0 %v136
  %v164 = vpop.f32.mrf.mxu0
  %v165 = vadd.f32 0.0, %v164
  %166 = vmatmul.f32.gmra.mxu0 %v139
  %v167 = vpop.f32.mrf.mxu0
  %v168 = vadd.f32 0.0, %v167
  %169 = vdwg.mxu0
  %v170 = vmax.f32 %v55, 0.0
  %v171 = vmax.f32 %v56, 0.0
  %v172 = vmax.f32 %v57, 0.0
  %v173 = vmax.f32 %v58, 0.0
  %vm174 = vcmask 130048
  %v176 = vsel %vm174, %v170, 0
  %v179 = vsel %vm174, %v171, 0
  %v182 = vsel %vm174, %v172, 0
  %v185 = vsel %vm174, %v173, 0
  %187 = vmatpush.msra.mxu0 0.0
  %188 = vmatpush.msra.mxu0 0.0
  %189 = vmatpush.msra.mxu0 0.0
  %190 = vmatpush.msra.mxu0 0.0
  %191 = vmatpush.msra.mxu0 0.0
  %192 = vmatpush.msra.mxu0 0.0
  %193 = vmatpush.msra.mxu0 0.0
  %194 = vmatpush.msra.mxu0 0.0
  %195 = vmatpush.msra.mxu0 0.0
  %196 = vmatpush.msra.mxu0 0.0
  %197 = vmatpush.msra.mxu0 0.0
  %198 = vmatpush.msra.mxu0 0.0
  %199 = vmatpush.msra.mxu0 0.0
  %200 = vmatpush.msra.mxu0 0.0
  %201 = vmatpush.msra.mxu0 %v66
  %202 = vmatpush.msra.mxu0 %v65
  %203 = vmatmul.f32.gmra.mxu0 %v176
  %v204 = vpop.f32.mrf.mxu0
  %v205 = vadd.f32 0.0, %v204
  %206 = vmatmul.f32.gmra.mxu0 %v179
  %v207 = vpop.f32.mrf.mxu0
  %v208 = vadd.f32 0.0, %v207
  %209 = vmatmul.f32.gmra.mxu0 %v182
  %v210 = vpop.f32.mrf.mxu0
  %v211 = vadd.f32 0.0, %v210
  %212 = vmatmul.f32.gmra.mxu0 %v185
  %v213 = vpop.f32.mrf.mxu0
  %v214 = vadd.f32 0.0, %v213
  %215 = vdwg.mxu0
  %v216 = vmax.f32 %v59, 0.0
  %v217 = vmax.f32 %v60, 0.0
  %v218 = vmax.f32 %v61, 0.0
  %v219 = vmax.f32 %v62, 0.0
  %v221 = vsel %vm174, %v216, 0
  %v224 = vsel %vm174, %v217, 0
  %v227 = vsel %vm174, %v218, 0
  %v230 = vsel %vm174, %v219, 0
  %232 = vmatpush.msra.mxu0 0.0
  %233 = vmatpush.msra.mxu0 0.0
  %234 = vmatpush.msra.mxu0 0.0
  %235 = vmatpush.msra.mxu0 0.0
  %236 = vmatpush.msra.mxu0 0.0
  %237 = vmatpush.msra.mxu0 0.0
  %238 = vmatpush.msra.mxu0 0.0
  %239 = vmatpush.msra.mxu0 0.0
  %240 = vmatpush.msra.mxu0 0.0
  %241 = vmatpush.msra.mxu0 0.0
  %242 = vmatpush.msra.mxu0 0.0
  %243 = vmatpush.msra.mxu0 0.0
  %244 = vmatpush.msra.mxu0 0.0
  %245 = vmatpush.msra.mxu0 0.0
  %246 = vmatpush.msra.mxu0 %v66
  %247 = vmatpush.msra.mxu0 %v65
  %248 = vmatmul.f32.gmra.mxu0 %v221
  %v249 = vpop.f32.mrf.mxu0
  %v250 = vadd.f32 0.0, %v249
  %251 = vmatmul.f32.gmra.mxu0 %v224
  %v252 = vpop.f32.mrf.mxu0
  %v253 = vadd.f32 0.0, %v252
  %254 = vmatmul.f32.gmra.mxu0 %v227
  %v255 = vpop.f32.mrf.mxu0
  %v256 = vadd.f32 0.0, %v255
  %257 = vmatmul.f32.gmra.mxu0 %v230
  %v258 = vpop.f32.mrf.mxu0
  %v259 = vadd.f32 0.0, %v258
  %260 = vdwg.mxu0
  %v261 = vmax.f32 %v114, 0.0
  %v262 = vmax.f32 %v117, 0.0
  %v263 = vmax.f32 %v120, 0.0
  %v264 = vmax.f32 %v123, 0.0
  %v265 = vmax.f32 %v159, 0.0
  %v266 = vmax.f32 %v162, 0.0
  %v267 = vmax.f32 %v165, 0.0
  %v268 = vmax.f32 %v168, 0.0
  %vm269 = vcmask 64512
  %v271 = vsel %vm269, %v265, 0
  %v274 = vsel %vm269, %v266, 0
  %v277 = vsel %vm269, %v267, 0
  %v280 = vsel %vm269, %v268, 0
  %282 = vmatpush.msra.mxu0 0.0
  %283 = vmatpush.msra.mxu0 0.0
  %284 = vmatpush.msra.mxu0 0.0
  %285 = vmatpush.msra.mxu0 0.0
  %286 = vmatpush.msra.mxu0 0.0
  %287 = vmatpush.msra.mxu0 0.0
  %288 = vmatpush.msra.mxu0 0.0
  %289 = vmatpush.msra.mxu0 0.0
  %290 = vmatpush.msra.mxu0 0.0
  %291 = vmatpush.msra.mxu0 0.0
  %292 = vmatpush.msra.mxu0 0.0
  %293 = vmatpush.msra.mxu0 0.0
  %294 = vmatpush.msra.mxu0 0.0
  %295 = vmatpush.msra.mxu0 0.0
  %296 = vmatpush.msra.mxu0 0.0
  %297 = vmatpush.msra.mxu0 %v68
  %298 = vmatmul.f32.gmra.mxu0 %v271
  %v299 = vpop.f32.mrf.mxu0
  %v300 = vadd.f32 0.0, %v299
  %301 = vmatmul.f32.gmra.mxu0 %v274
  %v302 = vpop.f32.mrf.mxu0
  %v303 = vadd.f32 0.0, %v302
  %304 = vmatmul.f32.gmra.mxu0 %v277
  %v305 = vpop.f32.mrf.mxu0
  %v306 = vadd.f32 0.0, %v305
  %307 = vmatmul.f32.gmra.mxu0 %v280
  %v308 = vpop.f32.mrf.mxu0
  %v309 = vadd.f32 0.0, %v308
  %310 = vdwg.mxu0
  %v312 = vsel %vm269, %v261, 0
  %v315 = vsel %vm269, %v262, 0
  %v318 = vsel %vm269, %v263, 0
  %v321 = vsel %vm269, %v264, 0
  %323 = vmatpush.msra.mxu0 0.0
  %324 = vmatpush.msra.mxu0 0.0
  %325 = vmatpush.msra.mxu0 0.0
  %326 = vmatpush.msra.mxu0 0.0
  %327 = vmatpush.msra.mxu0 0.0
  %328 = vmatpush.msra.mxu0 0.0
  %329 = vmatpush.msra.mxu0 0.0
  %330 = vmatpush.msra.mxu0 0.0
  %331 = vmatpush.msra.mxu0 0.0
  %332 = vmatpush.msra.mxu0 0.0
  %333 = vmatpush.msra.mxu0 0.0
  %334 = vmatpush.msra.mxu0 0.0
  %335 = vmatpush.msra.mxu0 0.0
  %336 = vmatpush.msra.mxu0 0.0
  %337 = vmatpush.msra.mxu0 0.0
  %338 = vmatpush.msra.mxu0 %v67
  %339 = vmatmul.f32.gmra.mxu0 %v312
  %v340 = vpop.f32.mrf.mxu0
  %v341 = vadd.f32 %v300, %v340
  %342 = vmatmul.f32.gmra.mxu0 %v315
  %v343 = vpop.f32.mrf.mxu0
  %v344 = vadd.f32 %v303, %v343
  %345 = vmatmul.f32.gmra.mxu0 %v318
  %v346 = vpop.f32.mrf.mxu0
  %v347 = vadd.f32 %v306, %v346
  %348 = vmatmul.f32.gmra.mxu0 %v321
  %v349 = vpop.f32.mrf.mxu0
  %v350 = vadd.f32 %v309, %v349
  %351 = vdwg.mxu0
  %v352 = vmax.f32 %v205, 0.0
  %v353 = vmax.f32 %v208, 0.0
  %v354 = vmax.f32 %v211, 0.0
  %v355 = vmax.f32 %v214, 0.0
  %v356 = vmax.f32 %v250, 0.0
  %v357 = vmax.f32 %v253, 0.0
  %v358 = vmax.f32 %v256, 0.0
  %v359 = vmax.f32 %v259, 0.0
  %v361 = vsel %vm269, %v356, 0
  %v364 = vsel %vm269, %v357, 0
  %v367 = vsel %vm269, %v358, 0
  %v370 = vsel %vm269, %v359, 0
  %372 = vmatpush.msra.mxu0 0.0
  %373 = vmatpush.msra.mxu0 0.0
  %374 = vmatpush.msra.mxu0 0.0
  %375 = vmatpush.msra.mxu0 0.0
  %376 = vmatpush.msra.mxu0 0.0
  %377 = vmatpush.msra.mxu0 0.0
  %378 = vmatpush.msra.mxu0 0.0
  %379 = vmatpush.msra.mxu0 0.0
  %380 = vmatpush.msra.mxu0 0.0
  %381 = vmatpush.msra.mxu0 0.0
  %382 = vmatpush.msra.mxu0 0.0
  %383 = vmatpush.msra.mxu0 0.0
  %384 = vmatpush.msra.mxu0 0.0
  %385 = vmatpush.msra.mxu0 0.0
  %386 = vmatpush.msra.mxu0 0.0
  %387 = vmatpush.msra.mxu0 %v70
  %388 = vmatmul.f32.gmra.mxu0 %v361
  %v389 = vpop.f32.mrf.mxu0
  %v390 = vadd.f32 0.0, %v389
  %391 = vmatmul.f32.gmra.mxu0 %v364
  %v392 = vpop.f32.mrf.mxu0
  %v393 = vadd.f32 0.0, %v392
  %394 = vmatmul.f32.gmra.mxu0 %v367
  %v395 = vpop.f32.mrf.mxu0
  %v396 = vadd.f32 0.0, %v395
  %397 = vmatmul.f32.gmra.mxu0 %v370
  %v398 = vpop.f32.mrf.mxu0
  %v399 = vadd.f32 0.0, %v398
  %400 = vdwg.mxu0
  %v402 = vsel %vm269, %v352, 0
  %v405 = vsel %vm269, %v353, 0
  %v408 = vsel %vm269, %v354, 0
  %v411 = vsel %vm269, %v355, 0
  %413 = vmatpush.msra.mxu0 0.0
  %414 = vmatpush.msra.mxu0 0.0
  %415 = vmatpush.msra.mxu0 0.0
  %416 = vmatpush.msra.mxu0 0.0
  %417 = vmatpush.msra.mxu0 0.0
  %418 = vmatpush.msra.mxu0 0.0
  %419 = vmatpush.msra.mxu0 0.0
  %420 = vmatpush.msra.mxu0 0.0
  %421 = vmatpush.msra.mxu0 0.0
  %422 = vmatpush.msra.mxu0 0.0
  %423 = vmatpush.msra.mxu0 0.0
  %424 = vmatpush.msra.mxu0 0.0
  %425 = vmatpush.msra.mxu0 0.0
  %426 = vmatpush.msra.mxu0 0.0
  %427 = vmatpush.msra.mxu0 0.0
  %428 = vmatpush.msra.mxu0 %v69
  %429 = vmatmul.f32.gmra.mxu0 %v402
  %v430 = vpop.f32.mrf.mxu0
  %v431 = vadd.f32 %v390, %v430
  %432 = vmatmul.f32.gmra.mxu0 %v405
  %v433 = vpop.f32.mrf.mxu0
  %v434 = vadd.f32 %v393, %v433
  %435 = vmatmul.f32.gmra.mxu0 %v408
  %v436 = vpop.f32.mrf.mxu0
  %v437 = vadd.f32 %v396, %v436
  %438 = vmatmul.f32.gmra.mxu0 %v411
  %v439 = vpop.f32.mrf.mxu0
  %v440 = vadd.f32 %v399, %v439
  %441 = vdwg.mxu0
  %v442 = vadd.f32 %v341, %v431
  %v443 = vadd.f32 %v344, %v434
  %v444 = vadd.f32 %v347, %v437
  %v445 = vadd.f32 %v350, %v440
  %446 = vmatpush.msra.mxu0 0.0
  %447 = vmatpush.msra.mxu0 0.0
  %448 = vmatpush.msra.mxu0 0.0
  %449 = vmatpush.msra.mxu0 0.0
  %450 = vmatpush.msra.mxu0 0.0
  %451 = vmatpush.msra.mxu0 0.0
  %452 = vmatpush.msra.mxu0 0.0
  %453 = vmatpush.msra.mxu0 0.0
  %454 = vmatpush.msra.mxu0 0.0
  %455 = vmatpush.msra.mxu0 0.0
  %456 = vmatpush.msra.mxu0 0.0
  %457 = vmatpush.msra.mxu0 0.0
  %458 = vmatpush.msra.mxu0 0.0
  %459 = vmatpush.msra.mxu0 0.0
  %460 = vmatpush.msra.mxu0 0.0
  %461 = vmatpush.msra.mxu0 %v72
  %462 = vmatmul.f32.gmra.mxu0 %v361
  %v463 = vpop.f32.mrf.mxu0
  %v464 = vadd.f32 0.0, %v463
  %465 = vmatmul.f32.gmra.mxu0 %v364
  %v466 = vpop.f32.mrf.mxu0
  %v467 = vadd.f32 0.0, %v466
  %468 = vmatmul.f32.gmra.mxu0 %v367
  %v469 = vpop.f32.mrf.mxu0
  %v470 = vadd.f32 0.0, %v469
  %471 = vmatmul.f32.gmra.mxu0 %v370
  %v472 = vpop.f32.mrf.mxu0
  %v473 = vadd.f32 0.0, %v472
  %474 = vdwg.mxu0
  %475 = vmatpush.msra.mxu0 0.0
  %476 = vmatpush.msra.mxu0 0.0
  %477 = vmatpush.msra.mxu0 0.0
  %478 = vmatpush.msra.mxu0 0.0
  %479 = vmatpush.msra.mxu0 0.0
  %480 = vmatpush.msra.mxu0 0.0
  %481 = vmatpush.msra.mxu0 0.0
  %482 = vmatpush.msra.mxu0 0.0
  %483 = vmatpush.msra.mxu0 0.0
  %484 = vmatpush.msra.mxu0 0.0
  %485 = vmatpush.msra.mxu0 0.0
  %486 = vmatpush.msra.mxu0 0.0
  %487 = vmatpush.msra.mxu0 0.0
  %488 = vmatpush.msra.mxu0 0.0
  %489 = vmatpush.msra.mxu0 0.0
  %490 = vmatpush.msra.mxu0 %v71
  %491 = vmatmul.f32.gmra.mxu0 %v402
  %v492 = vpop.f32.mrf.mxu0
  %v493 = vadd.f32 %v464, %v492
  %494 = vmatmul.f32.gmra.mxu0 %v405
  %v495 = vpop.f32.mrf.mxu0
  %v496 = vadd.f32 %v467, %v495
  %497 = vmatmul.f32.gmra.mxu0 %v408
  %v498 = vpop.f32.mrf.mxu0
  %v499 = vadd.f32 %v470, %v498
  %500 = vmatmul.f32.gmra.mxu0 %v411
  %v501 = vpop.f32.mrf.mxu0
  %v502 = vadd.f32 %v473, %v501
  %503 = vdwg.mxu0
  %v504 = vadd.f32 %v493, %v442
  %v505 = vadd.f32 %v496, %v443
  %v506 = vadd.f32 %v499, %v444
  %v507 = vadd.f32 %v502, %v445
  %508 = vmatpush.msra.mxu0 0.0
  %509 = vmatpush.msra.mxu0 0.0
  %510 = vmatpush.msra.mxu0 0.0
  %511 = vmatpush.msra.mxu0 0.0
  %512 = vmatpush.msra.mxu0 0.0
  %513 = vmatpush.msra.mxu0 0.0
  %514 = vmatpush.msra.mxu0 0.0
  %515 = vmatpush.msra.mxu0 0.0
  %516 = vmatpush.msra.mxu0 0.0
  %517 = vmatpush.msra.mxu0 0.0
  %518 = vmatpush.msra.mxu0 0.0
  %519 = vmatpush.msra.mxu0 0.0
  %520 = vmatpush.msra.mxu0 0.0
  %521 = vmatpush.msra.mxu0 0.0
  %522 = vmatpush.msra.mxu0 0.0
  %523 = vmatpush.msra.mxu0 %v74
  %524 = vmatmul.f32.gmra.mxu0 %v271
  %v525 = vpop.f32.mrf.mxu0
  %v526 = vadd.f32 0.0, %v525
  %527 = vmatmul.f32.gmra.mxu0 %v274
  %v528 = vpop.f32.mrf.mxu0
  %v529 = vadd.f32 0.0, %v528
  %530 = vmatmul.f32.gmra.mxu0 %v277
  %v531 = vpop.f32.mrf.mxu0
  %v532 = vadd.f32 0.0, %v531
  %533 = vmatmul.f32.gmra.mxu0 %v280
  %v534 = vpop.f32.mrf.mxu0
  %v535 = vadd.f32 0.0, %v534
  %536 = vdwg.mxu0
  %537 = vmatpush.msra.mxu0 0.0
  %538 = vmatpush.msra.mxu0 0.0
  %539 = vmatpush.msra.mxu0 0.0
  %540 = vmatpush.msra.mxu0 0.0
  %541 = vmatpush.msra.mxu0 0.0
  %542 = vmatpush.msra.mxu0 0.0
  %543 = vmatpush.msra.mxu0 0.0
  %544 = vmatpush.msra.mxu0 0.0
  %545 = vmatpush.msra.mxu0 0.0
  %546 = vmatpush.msra.mxu0 0.0
  %547 = vmatpush.msra.mxu0 0.0
  %548 = vmatpush.msra.mxu0 0.0
  %549 = vmatpush.msra.mxu0 0.0
  %550 = vmatpush.msra.mxu0 0.0
  %551 = vmatpush.msra.mxu0 0.0
  %552 = vmatpush.msra.mxu0 %v73
  %553 = vmatmul.f32.gmra.mxu0 %v312
  %v554 = vpop.f32.mrf.mxu0
  %v555 = vadd.f32 %v526, %v554
  %556 = vmatmul.f32.gmra.mxu0 %v315
  %v557 = vpop.f32.mrf.mxu0
  %v558 = vadd.f32 %v529, %v557
  %559 = vmatmul.f32.gmra.mxu0 %v318
  %v560 = vpop.f32.mrf.mxu0
  %v561 = vadd.f32 %v532, %v560
  %562 = vmatmul.f32.gmra.mxu0 %v321
  %v563 = vpop.f32.mrf.mxu0
  %v564 = vadd.f32 %v535, %v563
  %565 = vdwg.mxu0
  %v566 = vadd.f32 %v555, %v442
  %v567 = vadd.f32 %v558, %v443
  %v568 = vadd.f32 %v561, %v444
  %v569 = vadd.f32 %v564, %v445
  %v570 = vadd.f32 %v442, %v504
  %v571 = vadd.f32 %v443, %v505
  %v572 = vadd.f32 %v444, %v506
  %v573 = vadd.f32 %v445, %v507
  %574 = vst.msk [vmem:[%s14] sm:$0xff] %vm269, %v442
  %575 = vst.msk [vmem:[%s14 + $0x8] sm:$0xff] %vm269, %v443
  %576 = vst.msk [vmem:[%s14 + $0x10] sm:$0xff] %vm269, %v444
  %577 = vst.msk [vmem:[%s14 + $0x18] sm:$0xff] %vm269, %v445
  %s578 = scalar_lea.vmem %s14, 32
  %579 = vst.msk [vmem:[%s578] sm:$0xff] %vm269, %v504
  %580 = vst.msk [vmem:[%s578 + $0x8] sm:$0xff] %vm269, %v505
  %581 = vst.msk [vmem:[%s578 + $0x10] sm:$0xff] %vm269, %v506
  %582 = vst.msk [vmem:[%s578 + $0x18] sm:$0xff] %vm269, %v507
  %s583 = scalar_lea.vmem %s14, 64
  %584 = vst.msk [vmem:[%s583] sm:$0xff] %vm269, %v566
  %585 = vst.msk [vmem:[%s583 + $0x8] sm:$0xff] %vm269, %v567
  %586 = vst.msk [vmem:[%s583 + $0x10] sm:$0xff] %vm269, %v568
  %587 = vst.msk [vmem:[%s583 + $0x18] sm:$0xff] %vm269, %v569
  %s588 = scalar_lea.vmem %s14, 96
  %589 = vst.msk [vmem:[%s588] sm:$0xff] %vm269, %v570
  %590 = vst.msk [vmem:[%s588 + $0x8] sm:$0xff] %vm269, %v571
  %591 = vst.msk [vmem:[%s588 + $0x10] sm:$0xff] %vm269, %v572
  %592 = vst.msk [vmem:[%s588 + $0x18] sm:$0xff] %vm269, %v573
  // Predicated region
  $region58: #{darts_forward.7} parent=0 // pred_check
    _
  $region59: #{darts_forward.7} parent=0 // pred_check_branch
    %594 = sbr.rel (0) target = $region61
  $region60: #{darts_forward.7} parent=0 // pred_region
    _
  $region61: #{darts_forward.7} parent=0 // pred_fallthru
    _
  // Predicated region
  $region62: #{darts_forward.7} parent=0 // pred_check
    _
  $region63: #{darts_forward.7} parent=0 // pred_check_branch
    %596 = sbr.rel (0) target = $region65
  $region64: #{darts_forward.7} parent=0 // pred_region
    _
  $region65: #{darts_forward.7} parent=0 // pred_fallthru
    _

// kernel: darts_forward.9
$region0: #{darts_forward.9}
  #allocation0 [shape = 'u32[]', space=smem, size = 0x4, offset = 0x4, fixed_abs, tag = 'smem constant byte address 0x4 - core index']
  #allocation1 [shape = 'u32[72,128]{1,0:T(1,128)}', space=vmem, size = 0x9000, scoped, tag = 'internal scratch']
  %s0 = inlined_call_operand.vmem [shape: f32[8,512], index: 0, kind: input, shape index: {}]
  %s1 = inlined_call_operand.vmem [shape: f32[512,32], index: 1, kind: input, shape index: {}]
  %s2 = inlined_call_operand.vmem [shape: f32[1,32], index: 2, kind: input, shape index: {}]
  %s3 = inlined_call_operand.vmem [shape: f32[32,16], index: 3, kind: input, shape index: {}]
  %s4 = inlined_call_operand.vmem [shape: f32[1,16], index: 4, kind: input, shape index: {}]
  %s5 = inlined_call_operand.vmem [shape: f32[16,10], index: 5, kind: input, shape index: {}]
  %s6 = inlined_call_operand.vmem [shape: f32[1,10], index: 6, kind: input, shape index: {}]
  %s7 = inlined_call_operand.vmem [shape: f32[8,10], index: 7, kind: output, shape index: {}]
  %s8 = sld [smem:[#allocation0]]
  $region38: #{darts_forward.9} parent=0
    _
  %s10 = ssub.s32 1, %s8
  %s11 = scalar_select 0, %s10, %s8
  // Predicated region
  $region2: #{darts_forward.9} parent=0 // pred_check
    _
  $region3: #{darts_forward.9} parent=0 // pred_check_branch
    %13 = sbr.rel (0) target = $region5
  $region4: #{darts_forward.9} parent=0 // pred_region
    _
  $region5: #{darts_forward.9} parent=0 // pred_fallthru
    _
  // Predicated region
  $region6: #{darts_forward.9} parent=0 // pred_check
    _
  $region7: #{darts_forward.9} parent=0 // pred_check_branch
    %15 = sbr.rel (0) target = $region9
  $region8: #{darts_forward.9} parent=0 // pred_region
    _
  $region9: #{darts_forward.9} parent=0 // pred_fallthru
    _
  // Predicated region
  $region10: #{darts_forward.9} parent=0 // pred_check
    _
  $region11: #{darts_forward.9} parent=0 // pred_check_branch
    %17 = sbr.rel (0) target = $region13
  $region12: #{darts_forward.9} parent=0 // pred_region
    _
  $region13: #{darts_forward.9} parent=0 // pred_fallthru
    _
  // Predicated region
  $region14: #{darts_forward.9} parent=0 // pred_check
    _
  $region15: #{darts_forward.9} parent=0 // pred_check_branch
    %19 = sbr.rel (0) target = $region17
  $region16: #{darts_forward.9} parent=0 // pred_region
    _
  $region17: #{darts_forward.9} parent=0 // pred_fallthru
    _
  // Predicated region
  $region18: #{darts_forward.9} parent=0 // pred_check
    _
  $region19: #{darts_forward.9} parent=0 // pred_check_branch
    %21 = sbr.rel (0) target = $region21
  $region20: #{darts_forward.9} parent=0 // pred_region
    _
  $region21: #{darts_forward.9} parent=0 // pred_fallthru
    _
  // Predicated region
  $region22: #{darts_forward.9} parent=0 // pred_check
    _
  $region23: #{darts_forward.9} parent=0 // pred_check_branch
    %23 = sbr.rel (0) target = $region25
  $region24: #{darts_forward.9} parent=0 // pred_region
    _
  $region25: #{darts_forward.9} parent=0 // pred_fallthru
    _
  // Predicated region
  $region26: #{darts_forward.9} parent=0 // pred_check
    _
  $region27: #{darts_forward.9} parent=0 // pred_check_branch
    %25 = sbr.rel (0) target = $region29
  $region28: #{darts_forward.9} parent=0 // pred_region
    _
  $region29: #{darts_forward.9} parent=0 // pred_fallthru
    _
  %v26 = vld [vmem:[%s0] sm:$0xff]
  %v27 = vld [vmem:[%s0 + $0x8] sm:$0xff]
  %v28 = vld [vmem:[%s0 + $0x10] sm:$0xff]
  %v29 = vld [vmem:[%s0 + $0x18] sm:$0xff]
  %v30 = vld [vmem:[%s1] sm:$0xff]
  %v31 = vld [vmem:[%s1 + $0x8] sm:$0xff]
  %v32 = vld [vmem:[%s1 + $0x10] sm:$0xff]
  %v33 = vld [vmem:[%s1 + $0x18] sm:$0xff]
  %v34 = vld [vmem:[%s1 + $0x20] sm:$0xff]
  %v35 = vld [vmem:[%s1 + $0x28] sm:$0xff]
  %v36 = vld [vmem:[%s1 + $0x30] sm:$0xff]
  %v37 = vld [vmem:[%s1 + $0x38] sm:$0xff]
  %v38 = vld [vmem:[%s1 + $0x40] sm:$0xff]
  %v39 = vld [vmem:[%s1 + $0x48] sm:$0xff]
  %v40 = vld [vmem:[%s1 + $0x50] sm:$0xff]
  %v41 = vld [vmem:[%s1 + $0x58] sm:$0xff]
  %v42 = vld [vmem:[%s1 + $0x60] sm:$0xff]
  %v43 = vld [vmem:[%s1 + $0x68] sm:$0xff]
  %v44 = vld [vmem:[%s1 + $0x70] sm:$0xff]
  %v45 = vld [vmem:[%s1 + $0x78] sm:$0xff]
  %v46 = vld [vmem:[%s1 + $0x80] sm:$0xff]
  %v47 = vld [vmem:[%s1 + $0x88] sm:$0xff]
  %v48 = vld [vmem:[%s1 + $0x90] sm:$0xff]
  %v49 = vld [vmem:[%s1 + $0x98] sm:$0xff]
  %v50 = vld [vmem:[%s1 + $0xa0] sm:$0xff]
  %v51 = vld [vmem:[%s1 + $0xa8] sm:$0xff]
  %v52 = vld [vmem:[%s1 + $0xb0] sm:$0xff]
  %v53 = vld [vmem:[%s1 + $0xb8] sm:$0xff]
  %v54 = vld [vmem:[%s1 + $0xc0] sm:$0xff]
  %v55 = vld [vmem:[%s1 + $0xc8] sm:$0xff]
  %v56 = vld [vmem:[%s1 + $0xd0] sm:$0xff]
  %v57 = vld [vmem:[%s1 + $0xd8] sm:$0xff]
  %v58 = vld [vmem:[%s1 + $0xe0] sm:$0xff]
  %v59 = vld [vmem:[%s1 + $0xe8] sm:$0xff]
  %v60 = vld [vmem:[%s1 + $0xf0] sm:$0xff]
  %v61 = vld [vmem:[%s1 + $0xf8] sm:$0xff]
  %v62 = vld [vmem:[%s1 + $0x100] sm:$0xff]
  %v63 = vld [vmem:[%s1 + $0x108] sm:$0xff]
  %v64 = vld [vmem:[%s1 + $0x110] sm:$0xff]
  %v65 = vld [vmem:[%s1 + $0x118] sm:$0xff]
  %v66 = vld [vmem:[%s1 + $0x120] sm:$0xff]
  %v67 = vld [vmem:[%s1 + $0x128] sm:$0xff]
  %v68 = vld [vmem:[%s1 + $0x130] sm:$0xff]
  %v69 = vld [vmem:[%s1 + $0x138] sm:$0xff]
  %v70 = vld [vmem:[%s1 + $0x140] sm:$0xff]
  %v71 = vld [vmem:[%s1 + $0x148] sm:$0xff]
  %v72 = vld [vmem:[%s1 + $0x150] sm:$0xff]
  %v73 = vld [vmem:[%s1 + $0x158] sm:$0xff]
  %v74 = vld [vmem:[%s1 + $0x160] sm:$0xff]
  %v75 = vld [vmem:[%s1 + $0x168] sm:$0xff]
  %v76 = vld [vmem:[%s1 + $0x170] sm:$0xff]
  %v77 = vld [vmem:[%s1 + $0x178] sm:$0xff]
  %v78 = vld [vmem:[%s1 + $0x180] sm:$0xff]
  %v79 = vld [vmem:[%s1 + $0x188] sm:$0xff]
  %v80 = vld [vmem:[%s1 + $0x190] sm:$0xff]
  %v81 = vld [vmem:[%s1 + $0x198] sm:$0xff]
  %v82 = vld [vmem:[%s1 + $0x1a0] sm:$0xff]
  %v83 = vld [vmem:[%s1 + $0x1a8] sm:$0xff]
  %v84 = vld [vmem:[%s1 + $0x1b0] sm:$0xff]
  %v85 = vld [vmem:[%s1 + $0x1b8] sm:$0xff]
  %v86 = vld [vmem:[%s1 + $0x1c0] sm:$0xff]
  %v87 = vld [vmem:[%s1 + $0x1c8] sm:$0xff]
  %v88 = vld [vmem:[%s1 + $0x1d0] sm:$0xff]
  %v89 = vld [vmem:[%s1 + $0x1d8] sm:$0xff]
  %v90 = vld [vmem:[%s1 + $0x1e0] sm:$0xff]
  %v91 = vld [vmem:[%s1 + $0x1e8] sm:$0xff]
  %v92 = vld [vmem:[%s1 + $0x1f0] sm:$0xff]
  %v93 = vld [vmem:[%s1 + $0x1f8] sm:$0xff]
  %v94 = vld [vmem:[%s2] sm:$0x1]
  %v96 = vperm.slane %v94, 0
  %98 = vmatpush.msra.mxu0 %v45
  %99 = vmatpush.msra.mxu0 %v44
  %100 = vmatpush.msra.mxu0 %v43
  %101 = vmatpush.msra.mxu0 %v42
  %102 = vmatpush.msra.mxu0 %v41
  %103 = vmatpush.msra.mxu0 %v40
  %104 = vmatpush.msra.mxu0 %v39
  %105 = vmatpush.msra.mxu0 %v38
  %106 = vmatpush.msra.mxu0 %v37
  %107 = vmatpush.msra.mxu0 %v36
  %108 = vmatpush.msra.mxu0 %v35
  %109 = vmatpush.msra.mxu0 %v34
  %110 = vmatpush.msra.mxu0 %v33
  %111 = vmatpush.msra.mxu0 %v32
  %112 = vmatpush.msra.mxu0 %v31
  %113 = vmatpush.msra.mxu0 %v30
  %114 = vmatmul.f32.gmra.mxu0 %v26
  %v115 = vpop.f32.mrf.mxu0
  %v116 = vadd.f32 %v96, %v115
  %117 = vdwg.mxu0
  %118 = vmatpush.msra.mxu0 %v61
  %119 = vmatpush.msra.mxu0 %v60
  %120 = vmatpush.msra.mxu0 %v59
  %121 = vmatpush.msra.mxu0 %v58
  %122 = vmatpush.msra.mxu0 %v57
  %123 = vmatpush.msra.mxu0 %v56
  %124 = vmatpush.msra.mxu0 %v55
  %125 = vmatpush.msra.mxu0 %v54
  %126 = vmatpush.msra.mxu0 %v53
  %127 = vmatpush.msra.mxu0 %v52
  %128 = vmatpush.msra.mxu0 %v51
  %129 = vmatpush.msra.mxu0 %v50
  %130 = vmatpush.msra.mxu0 %v49
  %131 = vmatpush.msra.mxu0 %v48
  %132 = vmatpush.msra.mxu0 %v47
  %133 = vmatpush.msra.mxu0 %v46
  %134 = vmatmul.f32.gmra.mxu0 %v27
  %v135 = vpop.f32.mrf.mxu0
  %v136 = vadd.f32 %v116, %v135
  %137 = vdwg.mxu0
  %138 = vmatpush.msra.mxu0 %v77
  %139 = vmatpush.msra.mxu0 %v76
  %140 = vmatpush.msra.mxu0 %v75
  %141 = vmatpush.msra.mxu0 %v74
  %142 = vmatpush.msra.mxu0 %v73
  %143 = vmatpush.msra.mxu0 %v72
  %144 = vmatpush.msra.mxu0 %v71
  %145 = vmatpush.msra.mxu0 %v70
  %146 = vmatpush.msra.mxu0 %v69
  %147 = vmatpush.msra.mxu0 %v68
  %148 = vmatpush.msra.mxu0 %v67
  %149 = vmatpush.msra.mxu0 %v66
  %150 = vmatpush.msra.mxu0 %v65
  %151 = vmatpush.msra.mxu0 %v64
  %152 = vmatpush.msra.mxu0 %v63
  %153 = vmatpush.msra.mxu0 %v62
  %154 = vmatmul.f32.gmra.mxu0 %v28
  %v155 = vpop.f32.mrf.mxu0
  %v156 = vadd.f32 %v136, %v155
  %157 = vdwg.mxu0
  %158 = vmatpush.msra.mxu0 %v93
  %159 = vmatpush.msra.mxu0 %v92
  %160 = vmatpush.msra.mxu0 %v91
  %161 = vmatpush.msra.mxu0 %v90
  %162 = vmatpush.msra.mxu0 %v89
  %163 = vmatpush.msra.mxu0 %v88
  %164 = vmatpush.msra.mxu0 %v87
  %165 = vmatpush.msra.mxu0 %v86
  %166 = vmatpush.msra.mxu0 %v85
  %167 = vmatpush.msra.mxu0 %v84
  %168 = vmatpush.msra.mxu0 %v83
  %169 = vmatpush.msra.mxu0 %v82
  %170 = vmatpush.msra.mxu0 %v81
  %171 = vmatpush.msra.mxu0 %v80
  %172 = vmatpush.msra.mxu0 %v79
  %173 = vmatpush.msra.mxu0 %v78
  %174 = vmatmul.f32.gmra.mxu0 %v29
  %v175 = vpop.f32.mrf.mxu0
  %v176 = vadd.f32 %v156, %v175
  %177 = vdwg.mxu0
  %v178 = vmax.f32 %v176, 0.0
  %v179 = vld [vmem:[%s3] sm:$0xff]
  %v180 = vld [vmem:[%s3 + $0x8] sm:$0xff]
  %v181 = vld [vmem:[%s3 + $0x10] sm:$0xff]
  %v182 = vld [vmem:[%s3 + $0x18] sm:$0xff]
  %v183 = vld [vmem:[%s4] sm:$0x1]
  %v185 = vperm.slane %v183, 0
  %vm187 = vcmask 261120
  %v189 = vsel %vm187, %v178, 0
  %191 = vmatpush.msra.mxu0 0.0
  %192 = vmatpush.msra.mxu0 0.0
  %193 = vmatpush.msra.mxu0 0.0
  %194 = vmatpush.msra.mxu0 0.0
  %195 = vmatpush.msra.mxu0 0.0
  %196 = vmatpush.msra.mxu0 0.0
  %197 = vmatpush.msra.mxu0 0.0
  %198 = vmatpush.msra.mxu0 0.0
  %199 = vmatpush.msra.mxu0 0.0
  %200 = vmatpush.msra.mxu0 0.0
  %201 = vmatpush.msra.mxu0 0.0
  %202 = vmatpush.msra.mxu0 0.0
  %203 = vmatpush.msra.mxu0 %v182
  %204 = vmatpush.msra.mxu0 %v181
  %205 = vmatpush.msra.mxu0 %v180
  %206 = vmatpush.msra.mxu0 %v179
  %207 = vmatmul.f32.gmra.mxu0 %v189
  %v208 = vpop.f32.mrf.mxu0
  %v209 = vadd.f32 %v185, %v208
  %210 = vdwg.mxu0
  %v211 = vmax.f32 %v209, 0.0
  %v212 = vld [vmem:[%s5] sm:$0xff]
  %v213 = vld [vmem:[%s5 + $0x8] sm:$0xff]
  %v214 = vld [vmem:[%s6] sm:$0x1]
  %v216 = vperm.slane %v214, 0
  %vm218 = vcmask 130048
  %v220 = vsel %vm218, %v211, 0
  %222 = vmatpush.msra.mxu0 0.0
  %223 = vmatpush.msra.mxu0 0.0
  %224 = vmatpush.msra.mxu0 0.0
  %225 = vmatpush.msra.mxu0 0.0
  %226 = vmatpush.msra.mxu0 0.0
  %227 = vmatpush.msra.mxu0 0.0
  %228 = vmatpush.msra.mxu0 0.0
  %229 = vmatpush.msra.mxu0 0.0
  %230 = vmatpush.msra.mxu0 0.0
  %231 = vmatpush.msra.mxu0 0.0
  %232 = vmatpush.msra.mxu0 0.0
  %233 = vmatpush.msra.mxu0 0.0
  %234 = vmatpush.msra.mxu0 0.0
  %235 = vmatpush.msra.mxu0 0.0
  %236 = vmatpush.msra.mxu0 %v213
  %237 = vmatpush.msra.mxu0 %v212
  %238 = vmatmul.f32.gmra.mxu0 %v220
  %v239 = vpop.f32.mrf.mxu0
  %v240 = vadd.f32 %v216, %v239
  %241 = vdwg.mxu0
  %vm242 = vcmask 80896
  %243 = vst.msk [vmem:[%s7] sm:$0xff] %vm242, %v240
  // Predicated region
  $region30: #{darts_forward.9} parent=0 // pred_check
    _
  $region31: #{darts_forward.9} parent=0 // pred_check_branch
    %245 = sbr.rel (0) target = $region33
  $region32: #{darts_forward.9} parent=0 // pred_region
    _
  $region33: #{darts_forward.9} parent=0 // pred_fallthru
    _
  // Predicated region
  $region34: #{darts_forward.9} parent=0 // pred_check
    _
  $region35: #{darts_forward.9} parent=0 // pred_check_branch
    %247 = sbr.rel (0) target = $region37
  $region36: #{darts_forward.9} parent=0 // pred_region
    _
  $region37: #{darts_forward.9} parent=0 // pred_fallthru
    _

</llo_original>
